<compile_context>
chip_gen: v7x
topology: tpu7x:2x2x1
jax: 0.10.0
libtpu: 0.0.40
codegen_flags: <defaults>
</compile_context>

<pallas_src>
import jax
import jax.numpy as jnp
from jax import lax
from jax.experimental import pallas as pl
from jax.experimental.pallas import tpu as pltpu

# ---------------------------------------------------------------------------
# Model configuration (EfficientNet-B3 head)
# ---------------------------------------------------------------------------
ARCH_CHANNELS = {"b1": 1280, "b2": 1408, "b3": 1536, "b4": 1792,
                 "b5": 2048, "b6": 2304, "b7": 2560}
ARCH = "b3"
C = ARCH_CHANNELS[ARCH]          # 1536 feature channels out of the backbone

_HW_CHUNK = 16                   # bf16 sublane pack: a (16, 128) bf16 tile = one packed vreg
_TARGET_BLOCK_BYTES = 16 << 20   # ~16 MiB feature block per grid step (double-buffered by Pallas)
_VMEM_LIMIT_CAP = 56 << 20       # safe on v7x (64 MiB physical VMEM); v5e/v6e have 128 MiB


# ---------------------------------------------------------------------------
# Fused head kernel: adaptive-avg-pool(1,1) + flatten + dropout(eval) + Linear(C -> 1)
# ---------------------------------------------------------------------------
def detector_head_kernel(feat_ref, w_ref, b_ref, out_ref, acc_ref):
    """
    feat_ref : (TN, HW, C)  {bf16|f32}  VMEM  -- backbone feature maps, channels-last
    w_ref    : (1, C)       float32     VMEM  -- fc weight row (PyTorch (1, C), lane-dense)
    b_ref    : (1, 1)       float32     SMEM  -- fc bias
    out_ref  : (TN, 1)      float32     VMEM  -- logits
    acc_ref  : (TN, C)      float32     VMEM  -- spatial-sum accumulator (scratch)
    """
    tn, hw, _ = feat_ref.shape
    ch = _HW_CHUNK if hw >= _HW_CHUNK else hw
    n_full = hw // ch
    rem = hw - n_full * ch

    acc_ref[...] = jnp.zeros_like(acc_ref)

    # Chunked spatial reduction: upcast bf16 -> f32 one small chunk at a time so the f32
    # values live in vregs only (no full-tile f32 temporary / extra VMEM store traffic).
    def chunk_body(k, carry):
        start = pl.multiple_of(k * ch, ch)
        chunk = feat_ref[:, pl.ds(start, ch), :].astype(jnp.float32)   # (tn, ch, C)
        acc_ref[...] += jnp.sum(chunk, axis=1)
        return carry

    lax.fori_loop(0, n_full, chunk_body, 0, unroll=True)

    if rem:  # static remainder when HW is not a multiple of the chunk size
        tail = feat_ref[:, pl.ds(n_full * ch, rem), :].astype(jnp.float32)
        acc_ref[...] += jnp.sum(tail, axis=1)

    # AdaptiveAvgPool2d((1,1)): divide by the FULL spatial extent.
    pooled = acc_ref[...] * jnp.float32(1.0 / hw)                      # (tn, C) f32

    # Dropout(p=0.2) in eval mode is the identity.
    # Linear(C -> 1): lane-dense VPU multiply + cross-lane (XLU) reduction, no MXU.
    w_row = w_ref[...]                                                 # (1, C) f32, outside loop
    logits = jnp.sum(pooled * w_row, axis=-1, keepdims=True)           # (tn, 1)
    out_ref[...] = logits + b_ref[0, 0]


def _choose_tile_n(n, bytes_per_row, target_block_bytes=_TARGET_BLOCK_BYTES):
    """Pick the batch tile: multi-MB blocks, 8-aligned, and >=2 grid steps when affordable."""
    if n <= 8:
        # Tiny batch: one block covering the whole batch (block == full dims, always legal).
        return n
    tn_budget = max(8, (target_block_bytes // int(bytes_per_row)) // 8 * 8)
    tn_split = max(8, (n // 2) // 8 * 8)      # <= ~N/2 -> at least 2 grid steps (dual-TC v7x)
    return int(min(tn_budget, tn_split, n))


def deepfake_detector_head(features, fc_weight, fc_bias):
    """
    features  : (N, H*W, C) bf16/f32 -- encoder.forward_features output, channels-last,
                                        spatially flattened (backbone should emit this
                                        layout directly; no wrapper transpose/cast).
    fc_weight : (1, C)  -- PyTorch nn.Linear weight.
    fc_bias   : (1,)    -- PyTorch nn.Linear bias.
    returns   : (N, 1) float32 logits.
    """
    N, HW, Cin = features.shape
    assert fc_weight.shape == (1, Cin)

    feat_itemsize = features.dtype.itemsize
    bytes_per_row = HW * Cin * feat_itemsize
    tn = _choose_tile_n(N, bytes_per_row)
    grid = (pl.cdiv(N, tn),)

    # Explicit scoped-VMEM request sized from the actual tile footprint:
    #   double-buffered feature block + f32 accumulator + resident weight row (+ headroom),
    # capped so the same sizing is legal on v7x's 64 MiB physical VMEM.
    block_bytes = tn * bytes_per_row
    vmem_need = 2 * block_bytes + tn * Cin * 4 + Cin * 4 + 2 * tn * 4
    vmem_limit = int(min(max(2 * vmem_need, 32 << 20), _VMEM_LIMIT_CAP))

    w_row = fc_weight.astype(jnp.float32)                     # (1, C) lane-dense in VMEM
    b_smem = fc_bias.reshape(1, 1).astype(jnp.float32)        # (1, 1) scalar in SMEM

    cost = pl.CostEstimate(
        flops=2 * N * HW * Cin,                               # pool adds + fc multiply-adds
        transcendentals=0,
        bytes_accessed=N * HW * Cin * feat_itemsize + Cin * 4 + N * 4 + 4,
    )

    return pl.pallas_call(
        detector_head_kernel,
        out_shape=jax.ShapeDtypeStruct((N, 1), jnp.float32),
        grid=grid,
        in_specs=[
            pl.BlockSpec((tn, HW, Cin), lambda i: (i, 0, 0)),          # features -> VMEM (streamed)
            pl.BlockSpec((1, Cin), lambda i: (0, 0)),                  # fc weight -> VMEM (resident)
            pl.BlockSpec(memory_space=pltpu.MemorySpace.SMEM),         # fc bias   -> SMEM
        ],
        out_specs=pl.BlockSpec((tn, 1), lambda i: (i, 0)),             # few-KB total writeback
        scratch_shapes=[pltpu.VMEM((tn, Cin), jnp.float32)],           # spatial-sum accumulator
        compiler_params=pltpu.CompilerParams(
            dimension_semantics=("parallel",),                         # dual-TC shard on v7x
            vmem_limit_bytes=vmem_limit,
        ),
        cost_estimate=cost,
    )(features, w_row, b_smem)


# ---------------------------------------------------------------------------
# Pure-JAX reference (for a quick sanity check of the kernel)
# ---------------------------------------------------------------------------
def reference_head(features_flat, fc_weight, fc_bias):
    pooled = jnp.mean(features_flat.astype(jnp.float32), axis=1)        # (N, C)
    return pooled @ fc_weight.astype(jnp.float32).T + fc_bias           # (N, 1)


if __name__ == "__main__":
    # Small but shape-consistent example: backbone output feature maps for B3.
    N, H, W = 2, 8, 8
    HW = H * W
    key = jax.random.PRNGKey(0)
    k_feat, k_w, k_b = jax.random.split(key, 3)

    # Synthetic encoder output, generated directly in channels-last bf16 (N, H*W, C):
    # this is the layout/dtype the backbone should hand the head kernel.
    features = jax.random.normal(k_feat, (N, HW, C), dtype=jnp.float32).astype(jnp.bfloat16)

    # Deterministic fc init, matching nn.Linear(C, 1): U(-1/sqrt(C), 1/sqrt(C)).
    bound = 1.0 / jnp.sqrt(jnp.float32(C))
    fc_weight = jax.random.uniform(k_w, (1, C), minval=-bound, maxval=bound,
                                   dtype=jnp.float32)
    fc_bias = jax.random.uniform(k_b, (1,), minval=-bound, maxval=bound,
                                 dtype=jnp.float32)

    logits = deepfake_detector_head(features, fc_weight, fc_bias)
    logits = jax.block_until_ready(logits)

    ref = reference_head(features, fc_weight, fc_bias)
    assert logits.shape == (N, 1)
    assert jnp.allclose(logits, ref, atol=1e-3, rtol=1e-3), (logits, ref)

    print("KERNEL_OK")
</pallas_src>

<mosaic_0001>
module attributes {stable_mosaic.version = 11 : i64} {
  func.func @detector_head_kernel(%arg0: i32, %arg1: memref<2x64x1536xbf16, #tpu.memory_space<vmem>>, %arg2: memref<1x1536xf32, #tpu.memory_space<vmem>>, %arg3: memref<1x1xf32, #tpu.memory_space<smem>>, %arg4: memref<2x1xf32, #tpu.memory_space<vmem>>, %arg5: memref<2x1536xf32, #tpu.memory_space<vmem>>) attributes {dimension_semantics = [#tpu.dimension_semantics<parallel>], iteration_bounds = array<i64: 1>, scalar_prefetch = 0 : i64, scratch_operands = 1 : i64, tpu.core_type = #tpu.core_type<tc>, window_params = [{transform_indices = @transform_0, window_bounds = array<i64: 2, 64, 1536>}, {pipeline_mode = #tpu.pipeline_mode<synchronous>, transform_indices = @transform_1, window_bounds = array<i64: 1, 1536>}, {transform_indices = @transform_2, window_bounds = array<i64: 1, 1>}, {transform_indices = @transform_3, window_bounds = array<i64: 2, 1>}]} {
    %cst = arith.constant 0.000000e+00 : f32
    %0 = vector.broadcast %cst : f32 to vector<2x1536xf32>
    %c0 = arith.constant 0 : index
    %c0_0 = arith.constant 0 : index
    %1 = vector.load %arg5[%c0, %c0_0] : memref<2x1536xf32, #tpu.memory_space<vmem>>, vector<2x1536xf32>
    tpu.vector_store %arg5[%c0, %c0_0], %0 {strides = array<i32>} : memref<2x1536xf32, #tpu.memory_space<vmem>>, vector<2x1536xf32>,
    %c0_i32 = arith.constant 0 : i32
    %c16_i32 = arith.constant 16 : i32
    %2 = arith.muli %c0_i32, %c16_i32 : i32
    %3 = tpu.assume_multiple %2, 16 : i32
    %c0_1 = arith.constant 0 : index
    %4 = arith.index_cast %3 : i32 to index
    %c0_2 = arith.constant 0 : index
    %5 = vector.load %arg1[%c0_1, %4, %c0_2] : memref<2x64x1536xbf16, #tpu.memory_space<vmem>>, vector<2x16x1536xbf16>
    %6 = arith.extf %5 : vector<2x16x1536xbf16> to vector<2x16x1536xf32>
    %c0_3 = arith.constant 0 : index
    %c0_4 = arith.constant 0 : index
    %7 = vector.load %arg5[%c0_3, %c0_4] : memref<2x1536xf32, #tpu.memory_space<vmem>>, vector<2x1536xf32>
    %cst_5 = arith.constant dense<0.000000e+00> : vector<2x1536xf32>
    %8 = vector.multi_reduction <add>, %6, %cst_5 [1] : vector<2x16x1536xf32> to vector<2x1536xf32>
    %9 = arith.addf %7, %8 : vector<2x1536xf32>
    %c0_6 = arith.constant 0 : index
    %c0_7 = arith.constant 0 : index
    %10 = vector.load %arg5[%c0_6, %c0_7] : memref<2x1536xf32, #tpu.memory_space<vmem>>, vector<2x1536xf32>
    tpu.vector_store %arg5[%c0_6, %c0_7], %9 {strides = array<i32>} : memref<2x1536xf32, #tpu.memory_space<vmem>>, vector<2x1536xf32>,
    %c1_i32 = arith.constant 1 : i32
    %c16_i32_8 = arith.constant 16 : i32
    %11 = arith.muli %c1_i32, %c16_i32_8 : i32
    %12 = tpu.assume_multiple %11, 16 : i32
    %c0_9 = arith.constant 0 : index
    %13 = arith.index_cast %12 : i32 to index
    %c0_10 = arith.constant 0 : index
    %14 = vector.load %arg1[%c0_9, %13, %c0_10] : memref<2x64x1536xbf16, #tpu.memory_space<vmem>>, vector<2x16x1536xbf16>
    %15 = arith.extf %14 : vector<2x16x1536xbf16> to vector<2x16x1536xf32>
    %c0_11 = arith.constant 0 : index
    %c0_12 = arith.constant 0 : index
    %16 = vector.load %arg5[%c0_11, %c0_12] : memref<2x1536xf32, #tpu.memory_space<vmem>>, vector<2x1536xf32>
    %cst_13 = arith.constant dense<0.000000e+00> : vector<2x1536xf32>
    %17 = vector.multi_reduction <add>, %15, %cst_13 [1] : vector<2x16x1536xf32> to vector<2x1536xf32>
    %18 = arith.addf %16, %17 : vector<2x1536xf32>
    %c0_14 = arith.constant 0 : index
    %c0_15 = arith.constant 0 : index
    %19 = vector.load %arg5[%c0_14, %c0_15] : memref<2x1536xf32, #tpu.memory_space<vmem>>, vector<2x1536xf32>
    tpu.vector_store %arg5[%c0_14, %c0_15], %18 {strides = array<i32>} : memref<2x1536xf32, #tpu.memory_space<vmem>>, vector<2x1536xf32>,
    %c2_i32 = arith.constant 2 : i32
    %c16_i32_16 = arith.constant 16 : i32
    %20 = arith.muli %c2_i32, %c16_i32_16 : i32
    %21 = tpu.assume_multiple %20, 16 : i32
    %c0_17 = arith.constant 0 : index
    %22 = arith.index_cast %21 : i32 to index
    %c0_18 = arith.constant 0 : index
    %23 = vector.load %arg1[%c0_17, %22, %c0_18] : memref<2x64x1536xbf16, #tpu.memory_space<vmem>>, vector<2x16x1536xbf16>
    %24 = arith.extf %23 : vector<2x16x1536xbf16> to vector<2x16x1536xf32>
    %c0_19 = arith.constant 0 : index
    %c0_20 = arith.constant 0 : index
    %25 = vector.load %arg5[%c0_19, %c0_20] : memref<2x1536xf32, #tpu.memory_space<vmem>>, vector<2x1536xf32>
    %cst_21 = arith.constant dense<0.000000e+00> : vector<2x1536xf32>
    %26 = vector.multi_reduction <add>, %24, %cst_21 [1] : vector<2x16x1536xf32> to vector<2x1536xf32>
    %27 = arith.addf %25, %26 : vector<2x1536xf32>
    %c0_22 = arith.constant 0 : index
    %c0_23 = arith.constant 0 : index
    %28 = vector.load %arg5[%c0_22, %c0_23] : memref<2x1536xf32, #tpu.memory_space<vmem>>, vector<2x1536xf32>
    tpu.vector_store %arg5[%c0_22, %c0_23], %27 {strides = array<i32>} : memref<2x1536xf32, #tpu.memory_space<vmem>>, vector<2x1536xf32>,
    %c3_i32 = arith.constant 3 : i32
    %c16_i32_24 = arith.constant 16 : i32
    %29 = arith.muli %c3_i32, %c16_i32_24 : i32
    %30 = tpu.assume_multiple %29, 16 : i32
    %c0_25 = arith.constant 0 : index
    %31 = arith.index_cast %30 : i32 to index
    %c0_26 = arith.constant 0 : index
    %32 = vector.load %arg1[%c0_25, %31, %c0_26] : memref<2x64x1536xbf16, #tpu.memory_space<vmem>>, vector<2x16x1536xbf16>
    %33 = arith.extf %32 : vector<2x16x1536xbf16> to vector<2x16x1536xf32>
    %c0_27 = arith.constant 0 : index
    %c0_28 = arith.constant 0 : index
    %34 = vector.load %arg5[%c0_27, %c0_28] : memref<2x1536xf32, #tpu.memory_space<vmem>>, vector<2x1536xf32>
    %cst_29 = arith.constant dense<0.000000e+00> : vector<2x1536xf32>
    %35 = vector.multi_reduction <add>, %33, %cst_29 [1] : vector<2x16x1536xf32> to vector<2x1536xf32>
    %36 = arith.addf %34, %35 : vector<2x1536xf32>
    %c0_30 = arith.constant 0 : index
    %c0_31 = arith.constant 0 : index
    %37 = vector.load %arg5[%c0_30, %c0_31] : memref<2x1536xf32, #tpu.memory_space<vmem>>, vector<2x1536xf32>
    tpu.vector_store %arg5[%c0_30, %c0_31], %36 {strides = array<i32>} : memref<2x1536xf32, #tpu.memory_space<vmem>>, vector<2x1536xf32>,
    %c4_i32 = arith.constant 4 : i32
    %c0_32 = arith.constant 0 : index
    %c0_33 = arith.constant 0 : index
    %38 = vector.load %arg5[%c0_32, %c0_33] : memref<2x1536xf32, #tpu.memory_space<vmem>>, vector<2x1536xf32>
    %cst_34 = arith.constant 1.562500e-02 : f32
    %39 = vector.broadcast %cst_34 : f32 to vector<2x1536xf32>
    %40 = arith.mulf %38, %39 : vector<2x1536xf32>
    %c0_35 = arith.constant 0 : index
    %c0_36 = arith.constant 0 : index
    %41 = vector.load %arg2[%c0_35, %c0_36] : memref<1x1536xf32, #tpu.memory_space<vmem>>, vector<1x1536xf32>
    %42 = vector.broadcast %41 : vector<1x1536xf32> to vector<2x1536xf32>
    %43 = arith.mulf %40, %42 : vector<2x1536xf32>
    %cst_37 = arith.constant dense<0.000000e+00> : vector<2xf32>
    %44 = vector.multi_reduction <add>, %43, %cst_37 [1] : vector<2x1536xf32> to vector<2xf32>
    %45 = vector.shape_cast %44 : vector<2xf32> to vector<2x1xf32>
    %c0_38 = arith.constant 0 : index
    %c0_39 = arith.constant 0 : index
    %46 = memref.load %arg3[%c0_38, %c0_39] : memref<1x1xf32, #tpu.memory_space<smem>>
    %47 = vector.broadcast %46 : f32 to vector<2x1xf32>
    %48 = arith.addf %45, %47 : vector<2x1xf32>
    %c0_40 = arith.constant 0 : index
    %c0_41 = arith.constant 0 : index
    %49 = vector.load %arg4[%c0_40, %c0_41] : memref<2x1xf32, #tpu.memory_space<vmem>>, vector<2x1xf32>
    tpu.vector_store %arg4[%c0_40, %c0_41], %48 {strides = array<i32>} : memref<2x1xf32, #tpu.memory_space<vmem>>, vector<2x1xf32>,
    return
  }
  func.func @transform_0(%arg0: i32) -> (i32, i32, i32) {
    %c0_i32 = arith.constant 0 : i32
    %c0_i32_0 = arith.constant 0 : i32
    %c0_i32_1 = arith.constant 0 : i32
    return %arg0, %c0_i32, %c0_i32_0 : i32, i32, i32
  }
  func.func @transform_1(%arg0: i32) -> (i32, i32) {
    %c0_i32 = arith.constant 0 : i32
    %c0_i32_0 = arith.constant 0 : i32
    %c0_i32_1 = arith.constant 0 : i32
    return %c0_i32, %c0_i32_0 : i32, i32
  }
  func.func @transform_2(%arg0: i32) -> (i32, i32) {
    %c0_i32 = arith.constant 0 : i32
    %c0_i32_0 = arith.constant 0 : i32
    %c0_i32_1 = arith.constant 0 : i32
    return %c0_i32, %c0_i32_0 : i32, i32
  }
  func.func @transform_3(%arg0: i32) -> (i32, i32) {
    %c0_i32 = arith.constant 0 : i32
    %c0_i32_0 = arith.constant 0 : i32
    return %arg0, %c0_i32 : i32, i32
  }
}

</mosaic_0001>

<llo_original>
// kernel: tpu_custom_call.1
$region0: #{tpu_custom_call.1}
  #allocation0 [shape = 'u32[]', space=smem, size = 0x4, offset = 0x4, fixed_abs, tag = 'smem constant byte address 0x4 - core index']
  #allocation1 [shape = 'u32[144,128]{1,0:T(1,128)}', space=vmem, size = 0x12000, scoped, tag = 'internal scratch']
  #allocation2 [shape = 'f32[2,1536]{1,0:T(2,128)}', space=vmem, size = 0x3000, scoped, tag = 'scratch operand']
  #allocation3 [shape = 'f32[1,1]{1,0:T(1,128)S(6)}', space=smem, size = 0x200, scoped, tag = 'scoped memory for tpu_custom_call.1']
  %s0 = inlined_call_operand.hbm [shape: bf16[2,64,1536], index: 0, kind: input, shape index: {}]
  %s1 = inlined_call_operand.hbm [shape: f32[1,1536], index: 1, kind: input, shape index: {}]
  %s2 = inlined_call_operand.<no memory space> [shape: f32[1,1], index: 2, kind: input, shape index: {}]
  %s3 = inlined_call_operand.vmem [shape: f32[2,1], index: 3, kind: output, shape index: {}]
  %s4 = sld [smem:[#allocation0]]
  $region30: #{tpu_custom_call.1} parent=0
    _
  %s6 = ssub.s32 1, %s4
  %s7 = scalar_select 0, %s6, %s4
  %8 = sst [smem:[#allocation3]] %s2
  $region1: #{tpu_custom_call.1} parent=0
    #allocation4 [shape = 'u8[393216]{0}', space=vmem, size = 0x60000, scoped, tag = 'input window, operand 0, single buffered']
    #allocation5 [shape = 's32[1]{0}', space=sflag, size = 0x4, scoped, tag = 'scoped memory for tpu_custom_call.1']
    #allocation6 [shape = 'u8[6144]{0}', space=vmem, size = 0x1800, scoped, tag = 'input window, operand 1, single buffered']
    #allocation7 [shape = 's32[1]{0}', space=sflag, size = 0x4, scoped, tag = 'scoped memory for tpu_custom_call.1']
    %9 = vsyncpa [#allocation5], 0
    %10 = vsyncpa [#allocation7], 0
    // Predicated region
    $region2: #{tpu_custom_call.1} parent=1 // pred_check
      _
    $region3: #{tpu_custom_call.1} parent=1 // pred_check_branch
      %12 = sbr.rel (0) target = $region5
    $region4: #{tpu_custom_call.1} parent=1 // pred_region
      %s14 = ssub.s32 12288, 12288
      %15 = vsyncadd [#allocation5], %s14
      %s16 = sshll.u32 [#allocation4], 4
      %s17 = int_to_ptr.vmem [resolvable:$true] %s16
      %22 = dma.hbm_to_vmem [thread:$0]  %s0, 12288, %s17, [#allocation5], 768, 768, 48
    $region5: #{tpu_custom_call.1} parent=1 // pred_fallthru
      _
    // Predicated region
    $region6: #{tpu_custom_call.1} parent=1 // pred_check
      _
    $region7: #{tpu_custom_call.1} parent=1 // pred_check_branch
      %24 = sbr.rel (0) target = $region9
    $region8: #{tpu_custom_call.1} parent=1 // pred_region
      %s26 = ssub.s32 192, 192
      %27 = vsyncadd [#allocation7], %s26
      %s29 = sshll.u32 [#allocation6], 4
      %s30 = int_to_ptr.vmem [resolvable:$true] %s29
      %32 = dma.hbm_to_vmem [thread:$0]  %s1, 192, %s30, [#allocation7]
    $region9: #{tpu_custom_call.1} parent=1 // pred_fallthru
      _
    // Predicated region
    $region10: #{tpu_custom_call.1} parent=1 // pred_check
      _
    $region11: #{tpu_custom_call.1} parent=1 // pred_check_branch
      %34 = sbr.rel (0) target = $region13
    $region12: #{tpu_custom_call.1} parent=1 // pred_region
      _
    $region13: #{tpu_custom_call.1} parent=1 // pred_fallthru
      _
    // Predicated region
    $region14: #{tpu_custom_call.1} parent=1 // pred_check
      _
    $region15: #{tpu_custom_call.1} parent=1 // pred_check_branch
      %36 = sbr.rel (0) target = $region17
    $region16: #{tpu_custom_call.1} parent=1 // pred_region
      %37 = dma.done [#allocation5], 12288
    $region17: #{tpu_custom_call.1} parent=1 // pred_fallthru
      _
    // Predicated region
    $region18: #{tpu_custom_call.1} parent=1 // pred_check
      _
    $region19: #{tpu_custom_call.1} parent=1 // pred_check_branch
      %39 = sbr.rel (0) target = $region21
    $region20: #{tpu_custom_call.1} parent=1 // pred_region
      %40 = dma.done [#allocation7], 192
    $region21: #{tpu_custom_call.1} parent=1 // pred_fallthru
      _
    %41 = vst [vmem:[#allocation2] sm:$0xff] 0.0
    %42 = vst [vmem:[#allocation2 + $0x8] sm:$0xff] 0.0
    %43 = vst [vmem:[#allocation2 + $0x10] sm:$0xff] 0.0
    %s44 = smul.u32 0, 12
    %s45 = smul.addr %s44, 4
    %s46 = scalar_lea.vmem [#allocation4], %s45
    %v47 = vld [vmem:[%s46] sm:$0xff]
    %v48 = vld [vmem:[%s46 + $0x8] sm:$0xff]
    %v49 = vld [vmem:[%s46 + $0x10] sm:$0xff]
    %v50 = vld [vmem:[%s46 + $0x18] sm:$0xff]
    %v51 = vld [vmem:[%s46 + $0x20] sm:$0xff]
    %v52 = vld [vmem:[%s46 + $0x28] sm:$0xff]
    %v53 = vld [vmem:[%s46 + $0x30] sm:$0xff]
    %v54 = vld [vmem:[%s46 + $0x38] sm:$0xff]
    %v55 = vld [vmem:[%s46 + $0x40] sm:$0xff]
    %v56 = vld [vmem:[%s46 + $0x48] sm:$0xff]
    %v57 = vld [vmem:[%s46 + $0x50] sm:$0xff]
    %v58 = vld [vmem:[%s46 + $0x58] sm:$0xff]
    %v59 = vld [vmem:[%s46 + $0x180] sm:$0xff]
    %v60 = vld [vmem:[%s46 + $0x188] sm:$0xff]
    %v61 = vld [vmem:[%s46 + $0x190] sm:$0xff]
    %v62 = vld [vmem:[%s46 + $0x198] sm:$0xff]
    %v63 = vld [vmem:[%s46 + $0x1a0] sm:$0xff]
    %v64 = vld [vmem:[%s46 + $0x1a8] sm:$0xff]
    %v65 = vld [vmem:[%s46 + $0x1b0] sm:$0xff]
    %v66 = vld [vmem:[%s46 + $0x1b8] sm:$0xff]
    %v67 = vld [vmem:[%s46 + $0x1c0] sm:$0xff]
    %v68 = vld [vmem:[%s46 + $0x1c8] sm:$0xff]
    %v69 = vld [vmem:[%s46 + $0x1d0] sm:$0xff]
    %v70 = vld [vmem:[%s46 + $0x1d8] sm:$0xff]
    %v71 = vunpack.c.l.bf16 %v47
    %v72 = vunpack.c.h.bf16 %v47
    %v73 = vunpack.c.l.bf16 %v48
    %v74 = vunpack.c.h.bf16 %v48
    %v75 = vunpack.c.l.bf16 %v49
    %v76 = vunpack.c.h.bf16 %v49
    %v77 = vunpack.c.l.bf16 %v50
    %v78 = vunpack.c.h.bf16 %v50
    %v79 = vunpack.c.l.bf16 %v51
    %v80 = vunpack.c.h.bf16 %v51
    %v81 = vunpack.c.l.bf16 %v52
    %v82 = vunpack.c.h.bf16 %v52
    %v83 = vunpack.c.l.bf16 %v53
    %v84 = vunpack.c.h.bf16 %v53
    %v85 = vunpack.c.l.bf16 %v54
    %v86 = vunpack.c.h.bf16 %v54
    %v87 = vunpack.c.l.bf16 %v55
    %v88 = vunpack.c.h.bf16 %v55
    %v89 = vunpack.c.l.bf16 %v56
    %v90 = vunpack.c.h.bf16 %v56
    %v91 = vunpack.c.l.bf16 %v57
    %v92 = vunpack.c.h.bf16 %v57
    %v93 = vunpack.c.l.bf16 %v58
    %v94 = vunpack.c.h.bf16 %v58
    %v95 = vunpack.c.l.bf16 %v59
    %v96 = vunpack.c.h.bf16 %v59
    %v97 = vunpack.c.l.bf16 %v60
    %v98 = vunpack.c.h.bf16 %v60
    %v99 = vunpack.c.l.bf16 %v61
    %v100 = vunpack.c.h.bf16 %v61
    %v101 = vunpack.c.l.bf16 %v62
    %v102 = vunpack.c.h.bf16 %v62
    %v103 = vunpack.c.l.bf16 %v63
    %v104 = vunpack.c.h.bf16 %v63
    %v105 = vunpack.c.l.bf16 %v64
    %v106 = vunpack.c.h.bf16 %v64
    %v107 = vunpack.c.l.bf16 %v65
    %v108 = vunpack.c.h.bf16 %v65
    %v109 = vunpack.c.l.bf16 %v66
    %v110 = vunpack.c.h.bf16 %v66
    %v111 = vunpack.c.l.bf16 %v67
    %v112 = vunpack.c.h.bf16 %v67
    %v113 = vunpack.c.l.bf16 %v68
    %v114 = vunpack.c.h.bf16 %v68
    %v115 = vunpack.c.l.bf16 %v69
    %v116 = vunpack.c.h.bf16 %v69
    %v117 = vunpack.c.l.bf16 %v70
    %v118 = vunpack.c.h.bf16 %v70
    %v119 = vld [vmem:[#allocation2] sm:$0xff]
    %v120 = vld [vmem:[#allocation2 + $0x8] sm:$0xff]
    %v121 = vld [vmem:[#allocation2 + $0x10] sm:$0xff]
    %v122 = vadd.f32 %v71, %v83
    %v123 = vrot.slane %v122, 4
    %v124 = vadd.f32 %v122, %v123
    %v125 = vrot.slane %v124, 2
    %v126 = vadd.f32 %v124, %v125
    %v127 = vrot.slane %v126, 1
    %v128 = vadd.f32 %v126, %v127
    %v129 = vadd.f32 %v72, %v84
    %v130 = vrot.slane %v129, 4
    %v131 = vadd.f32 %v129, %v130
    %v132 = vrot.slane %v131, 2
    %v133 = vadd.f32 %v131, %v132
    %v134 = vrot.slane %v133, 1
    %v135 = vadd.f32 %v133, %v134
    %v136 = vadd.f32 %v73, %v85
    %v137 = vrot.slane %v136, 4
    %v138 = vadd.f32 %v136, %v137
    %v139 = vrot.slane %v138, 2
    %v140 = vadd.f32 %v138, %v139
    %v141 = vrot.slane %v140, 1
    %v142 = vadd.f32 %v140, %v141
    %v143 = vadd.f32 %v74, %v86
    %v144 = vrot.slane %v143, 4
    %v145 = vadd.f32 %v143, %v144
    %v146 = vrot.slane %v145, 2
    %v147 = vadd.f32 %v145, %v146
    %v148 = vrot.slane %v147, 1
    %v149 = vadd.f32 %v147, %v148
    %v150 = vadd.f32 %v75, %v87
    %v151 = vrot.slane %v150, 4
    %v152 = vadd.f32 %v150, %v151
    %v153 = vrot.slane %v152, 2
    %v154 = vadd.f32 %v152, %v153
    %v155 = vrot.slane %v154, 1
    %v156 = vadd.f32 %v154, %v155
    %v157 = vadd.f32 %v76, %v88
    %v158 = vrot.slane %v157, 4
    %v159 = vadd.f32 %v157, %v158
    %v160 = vrot.slane %v159, 2
    %v161 = vadd.f32 %v159, %v160
    %v162 = vrot.slane %v161, 1
    %v163 = vadd.f32 %v161, %v162
    %v164 = vadd.f32 %v77, %v89
    %v165 = vrot.slane %v164, 4
    %v166 = vadd.f32 %v164, %v165
    %v167 = vrot.slane %v166, 2
    %v168 = vadd.f32 %v166, %v167
    %v169 = vrot.slane %v168, 1
    %v170 = vadd.f32 %v168, %v169
    %v171 = vadd.f32 %v78, %v90
    %v172 = vrot.slane %v171, 4
    %v173 = vadd.f32 %v171, %v172
    %v174 = vrot.slane %v173, 2
    %v175 = vadd.f32 %v173, %v174
    %v176 = vrot.slane %v175, 1
    %v177 = vadd.f32 %v175, %v176
    %v178 = vadd.f32 %v79, %v91
    %v179 = vrot.slane %v178, 4
    %v180 = vadd.f32 %v178, %v179
    %v181 = vrot.slane %v180, 2
    %v182 = vadd.f32 %v180, %v181
    %v183 = vrot.slane %v182, 1
    %v184 = vadd.f32 %v182, %v183
    %v185 = vadd.f32 %v80, %v92
    %v186 = vrot.slane %v185, 4
    %v187 = vadd.f32 %v185, %v186
    %v188 = vrot.slane %v187, 2
    %v189 = vadd.f32 %v187, %v188
    %v190 = vrot.slane %v189, 1
    %v191 = vadd.f32 %v189, %v190
    %v192 = vadd.f32 %v81, %v93
    %v193 = vrot.slane %v192, 4
    %v194 = vadd.f32 %v192, %v193
    %v195 = vrot.slane %v194, 2
    %v196 = vadd.f32 %v194, %v195
    %v197 = vrot.slane %v196, 1
    %v198 = vadd.f32 %v196, %v197
    %v199 = vadd.f32 %v82, %v94
    %v200 = vrot.slane %v199, 4
    %v201 = vadd.f32 %v199, %v200
    %v202 = vrot.slane %v201, 2
    %v203 = vadd.f32 %v201, %v202
    %v204 = vrot.slane %v203, 1
    %v205 = vadd.f32 %v203, %v204
    %v206 = vadd.f32 %v95, %v107
    %v207 = vrot.slane %v206, 4
    %v208 = vadd.f32 %v206, %v207
    %v209 = vrot.slane %v208, 2
    %v210 = vadd.f32 %v208, %v209
    %v211 = vrot.slane %v210, 1
    %v212 = vadd.f32 %v210, %v211
    %v213 = vadd.f32 %v96, %v108
    %v214 = vrot.slane %v213, 4
    %v215 = vadd.f32 %v213, %v214
    %v216 = vrot.slane %v215, 2
    %v217 = vadd.f32 %v215, %v216
    %v218 = vrot.slane %v217, 1
    %v219 = vadd.f32 %v217, %v218
    %v220 = vadd.f32 %v97, %v109
    %v221 = vrot.slane %v220, 4
    %v222 = vadd.f32 %v220, %v221
    %v223 = vrot.slane %v222, 2
    %v224 = vadd.f32 %v222, %v223
    %v225 = vrot.slane %v224, 1
    %v226 = vadd.f32 %v224, %v225
    %v227 = vadd.f32 %v98, %v110
    %v228 = vrot.slane %v227, 4
    %v229 = vadd.f32 %v227, %v228
    %v230 = vrot.slane %v229, 2
    %v231 = vadd.f32 %v229, %v230
    %v232 = vrot.slane %v231, 1
    %v233 = vadd.f32 %v231, %v232
    %v234 = vadd.f32 %v99, %v111
    %v235 = vrot.slane %v234, 4
    %v236 = vadd.f32 %v234, %v235
    %v237 = vrot.slane %v236, 2
    %v238 = vadd.f32 %v236, %v237
    %v239 = vrot.slane %v238, 1
    %v240 = vadd.f32 %v238, %v239
    %v241 = vadd.f32 %v100, %v112
    %v242 = vrot.slane %v241, 4
    %v243 = vadd.f32 %v241, %v242
    %v244 = vrot.slane %v243, 2
    %v245 = vadd.f32 %v243, %v244
    %v246 = vrot.slane %v245, 1
    %v247 = vadd.f32 %v245, %v246
    %v248 = vadd.f32 %v101, %v113
    %v249 = vrot.slane %v248, 4
    %v250 = vadd.f32 %v248, %v249
    %v251 = vrot.slane %v250, 2
    %v252 = vadd.f32 %v250, %v251
    %v253 = vrot.slane %v252, 1
    %v254 = vadd.f32 %v252, %v253
    %v255 = vadd.f32 %v102, %v114
    %v256 = vrot.slane %v255, 4
    %v257 = vadd.f32 %v255, %v256
    %v258 = vrot.slane %v257, 2
    %v259 = vadd.f32 %v257, %v258
    %v260 = vrot.slane %v259, 1
    %v261 = vadd.f32 %v259, %v260
    %v262 = vadd.f32 %v103, %v115
    %v263 = vrot.slane %v262, 4
    %v264 = vadd.f32 %v262, %v263
    %v265 = vrot.slane %v264, 2
    %v266 = vadd.f32 %v264, %v265
    %v267 = vrot.slane %v266, 1
    %v268 = vadd.f32 %v266, %v267
    %v269 = vadd.f32 %v104, %v116
    %v270 = vrot.slane %v269, 4
    %v271 = vadd.f32 %v269, %v270
    %v272 = vrot.slane %v271, 2
    %v273 = vadd.f32 %v271, %v272
    %v274 = vrot.slane %v273, 1
    %v275 = vadd.f32 %v273, %v274
    %v276 = vadd.f32 %v105, %v117
    %v277 = vrot.slane %v276, 4
    %v278 = vadd.f32 %v276, %v277
    %v279 = vrot.slane %v278, 2
    %v280 = vadd.f32 %v278, %v279
    %v281 = vrot.slane %v280, 1
    %v282 = vadd.f32 %v280, %v281
    %v283 = vadd.f32 %v106, %v118
    %v284 = vrot.slane %v283, 4
    %v285 = vadd.f32 %v283, %v284
    %v286 = vrot.slane %v285, 2
    %v287 = vadd.f32 %v285, %v286
    %v288 = vrot.slane %v287, 1
    %v289 = vadd.f32 %v287, %v288
    %v314 = vcombine.low %v128, %v135
    %v315 = vcombine.low %v142, %v149
    %v317 = vunpack.c.l.s4 1983009808
    %v318 = vunpack.c.0.s8 %v317
    %v319 = vlaneseq
    %v320 = vshrl.u32 %v319, 7
    %v321 = vsub.s32 %v318, %v320
    %v322 = vrot.slane %v314, %v321
    %v324 = vunpack.c.l.s4 1983009808
    %v325 = vunpack.c.0.s8 %v324
    %v326 = vlaneseq
    %v327 = vshrl.u32 %v326, 7
    %v328 = vsub.s32 %v325, %v327
    %v329 = vrot.slane %v315, %v328
    %v330 = vcombine.low %v322, %v329
    %v331 = vcombine.low %v156, %v163
    %v332 = vcombine.low %v170, %v177
    %v334 = vunpack.c.l.s4 1983009808
    %v335 = vunpack.c.0.s8 %v334
    %v336 = vlaneseq
    %v337 = vshrl.u32 %v336, 7
    %v338 = vsub.s32 %v335, %v337
    %v339 = vrot.slane %v331, %v338
    %v341 = vunpack.c.l.s4 1983009808
    %v342 = vunpack.c.0.s8 %v341
    %v343 = vlaneseq
    %v344 = vshrl.u32 %v343, 7
    %v345 = vsub.s32 %v342, %v344
    %v346 = vrot.slane %v332, %v345
    %v347 = vcombine.low %v339, %v346
    %v348 = vcombine.low %v184, %v191
    %v349 = vcombine.low %v198, %v205
    %v351 = vunpack.c.l.s4 1983009808
    %v352 = vunpack.c.0.s8 %v351
    %v353 = vlaneseq
    %v354 = vshrl.u32 %v353, 7
    %v355 = vsub.s32 %v352, %v354
    %v356 = vrot.slane %v348, %v355
    %v358 = vunpack.c.l.s4 1983009808
    %v359 = vunpack.c.0.s8 %v358
    %v360 = vlaneseq
    %v361 = vshrl.u32 %v360, 7
    %v362 = vsub.s32 %v359, %v361
    %v363 = vrot.slane %v349, %v362
    %v364 = vcombine.low %v356, %v363
    %v365 = vcombine.low %v212, %v219
    %v366 = vcombine.low %v226, %v233
    %v368 = vunpack.c.l.s4 1983009808
    %v369 = vunpack.c.0.s8 %v368
    %v370 = vlaneseq
    %v371 = vshrl.u32 %v370, 7
    %v372 = vsub.s32 %v369, %v371
    %v373 = vrot.slane %v365, %v372
    %v375 = vunpack.c.l.s4 1983009808
    %v376 = vunpack.c.0.s8 %v375
    %v377 = vlaneseq
    %v378 = vshrl.u32 %v377, 7
    %v379 = vsub.s32 %v376, %v378
    %v380 = vrot.slane %v366, %v379
    %v381 = vcombine.low %v373, %v380
    %v382 = vcombine.low %v240, %v247
    %v383 = vcombine.low %v254, %v261
    %v385 = vunpack.c.l.s4 1983009808
    %v386 = vunpack.c.0.s8 %v385
    %v387 = vlaneseq
    %v388 = vshrl.u32 %v387, 7
    %v389 = vsub.s32 %v386, %v388
    %v390 = vrot.slane %v382, %v389
    %v392 = vunpack.c.l.s4 1983009808
    %v393 = vunpack.c.0.s8 %v392
    %v394 = vlaneseq
    %v395 = vshrl.u32 %v394, 7
    %v396 = vsub.s32 %v393, %v395
    %v397 = vrot.slane %v383, %v396
    %v398 = vcombine.low %v390, %v397
    %v399 = vcombine.low %v268, %v275
    %v400 = vcombine.low %v282, %v289
    %v402 = vunpack.c.l.s4 1983009808
    %v403 = vunpack.c.0.s8 %v402
    %v404 = vlaneseq
    %v405 = vshrl.u32 %v404, 7
    %v406 = vsub.s32 %v403, %v405
    %v407 = vrot.slane %v399, %v406
    %v409 = vunpack.c.l.s4 1983009808
    %v410 = vunpack.c.0.s8 %v409
    %v411 = vlaneseq
    %v412 = vshrl.u32 %v411, 7
    %v413 = vsub.s32 %v410, %v412
    %v414 = vrot.slane %v400, %v413
    %v415 = vcombine.low %v407, %v414
    %vm416 = vcmask 1044484
    %v417 = vsel %vm416, %v330, %v330
    %vm418 = vcmask 1046534
    %v419 = vsel %vm418, %v330, %v417
    %v420 = vrot.slane %v381, 7
    %vm421 = vcmask 1041409
    %v422 = vsel %vm421, %v420, %v419
    %vm423 = vcmask 1043459
    %v424 = vsel %vm423, %v420, %v422
    %vm425 = vcmask 1045509
    %v426 = vsel %vm425, %v420, %v424
    %vm427 = vcmask 1047559
    %v428 = vsel %vm427, %v420, %v426
    %v429 = vsel %vm416, %v347, %v347
    %v430 = vsel %vm418, %v347, %v429
    %v431 = vrot.slane %v398, 7
    %v432 = vsel %vm421, %v431, %v430
    %v433 = vsel %vm423, %v431, %v432
    %v434 = vsel %vm425, %v431, %v433
    %v435 = vsel %vm427, %v431, %v434
    %v436 = vsel %vm416, %v364, %v364
    %v437 = vsel %vm418, %v364, %v436
    %v438 = vrot.slane %v415, 7
    %v439 = vsel %vm421, %v438, %v437
    %v440 = vsel %vm423, %v438, %v439
    %v441 = vsel %vm425, %v438, %v440
    %v442 = vsel %vm427, %v438, %v441
    %v446 = vadd.f32 %v119, %v428
    %v447 = vadd.f32 %v120, %v435
    %v448 = vadd.f32 %v121, %v442
    %449 = vst [vmem:[#allocation2] sm:$0xff] %v446
    %450 = vst [vmem:[#allocation2 + $0x8] sm:$0xff] %v447
    %451 = vst [vmem:[#allocation2 + $0x10] sm:$0xff] %v448
    %s452 = smul.u32 2, 12
    %s453 = smul.addr %s452, 4
    %s454 = scalar_lea.vmem [#allocation4], %s453
    %v455 = vld [vmem:[%s454] sm:$0xff]
    %v456 = vld [vmem:[%s454 + $0x8] sm:$0xff]
    %v457 = vld [vmem:[%s454 + $0x10] sm:$0xff]
    %v458 = vld [vmem:[%s454 + $0x18] sm:$0xff]
    %v459 = vld [vmem:[%s454 + $0x20] sm:$0xff]
    %v460 = vld [vmem:[%s454 + $0x28] sm:$0xff]
    %v461 = vld [vmem:[%s454 + $0x30] sm:$0xff]
    %v462 = vld [vmem:[%s454 + $0x38] sm:$0xff]
    %v463 = vld [vmem:[%s454 + $0x40] sm:$0xff]
    %v464 = vld [vmem:[%s454 + $0x48] sm:$0xff]
    %v465 = vld [vmem:[%s454 + $0x50] sm:$0xff]
    %v466 = vld [vmem:[%s454 + $0x58] sm:$0xff]
    %v467 = vld [vmem:[%s454 + $0x180] sm:$0xff]
    %v468 = vld [vmem:[%s454 + $0x188] sm:$0xff]
    %v469 = vld [vmem:[%s454 + $0x190] sm:$0xff]
    %v470 = vld [vmem:[%s454 + $0x198] sm:$0xff]
    %v471 = vld [vmem:[%s454 + $0x1a0] sm:$0xff]
    %v472 = vld [vmem:[%s454 + $0x1a8] sm:$0xff]
    %v473 = vld [vmem:[%s454 + $0x1b0] sm:$0xff]
    %v474 = vld [vmem:[%s454 + $0x1b8] sm:$0xff]
    %v475 = vld [vmem:[%s454 + $0x1c0] sm:$0xff]
    %v476 = vld [vmem:[%s454 + $0x1c8] sm:$0xff]
    %v477 = vld [vmem:[%s454 + $0x1d0] sm:$0xff]
    %v478 = vld [vmem:[%s454 + $0x1d8] sm:$0xff]
    %v479 = vunpack.c.l.bf16 %v455
    %v480 = vunpack.c.h.bf16 %v455
    %v481 = vunpack.c.l.bf16 %v456
    %v482 = vunpack.c.h.bf16 %v456
    %v483 = vunpack.c.l.bf16 %v457
    %v484 = vunpack.c.h.bf16 %v457
    %v485 = vunpack.c.l.bf16 %v458
    %v486 = vunpack.c.h.bf16 %v458
    %v487 = vunpack.c.l.bf16 %v459
    %v488 = vunpack.c.h.bf16 %v459
    %v489 = vunpack.c.l.bf16 %v460
    %v490 = vunpack.c.h.bf16 %v460
    %v491 = vunpack.c.l.bf16 %v461
    %v492 = vunpack.c.h.bf16 %v461
    %v493 = vunpack.c.l.bf16 %v462
    %v494 = vunpack.c.h.bf16 %v462
    %v495 = vunpack.c.l.bf16 %v463
    %v496 = vunpack.c.h.bf16 %v463
    %v497 = vunpack.c.l.bf16 %v464
    %v498 = vunpack.c.h.bf16 %v464
    %v499 = vunpack.c.l.bf16 %v465
    %v500 = vunpack.c.h.bf16 %v465
    %v501 = vunpack.c.l.bf16 %v466
    %v502 = vunpack.c.h.bf16 %v466
    %v503 = vunpack.c.l.bf16 %v467
    %v504 = vunpack.c.h.bf16 %v467
    %v505 = vunpack.c.l.bf16 %v468
    %v506 = vunpack.c.h.bf16 %v468
    %v507 = vunpack.c.l.bf16 %v469
    %v508 = vunpack.c.h.bf16 %v469
    %v509 = vunpack.c.l.bf16 %v470
    %v510 = vunpack.c.h.bf16 %v470
    %v511 = vunpack.c.l.bf16 %v471
    %v512 = vunpack.c.h.bf16 %v471
    %v513 = vunpack.c.l.bf16 %v472
    %v514 = vunpack.c.h.bf16 %v472
    %v515 = vunpack.c.l.bf16 %v473
    %v516 = vunpack.c.h.bf16 %v473
    %v517 = vunpack.c.l.bf16 %v474
    %v518 = vunpack.c.h.bf16 %v474
    %v519 = vunpack.c.l.bf16 %v475
    %v520 = vunpack.c.h.bf16 %v475
    %v521 = vunpack.c.l.bf16 %v476
    %v522 = vunpack.c.h.bf16 %v476
    %v523 = vunpack.c.l.bf16 %v477
    %v524 = vunpack.c.h.bf16 %v477
    %v525 = vunpack.c.l.bf16 %v478
    %v526 = vunpack.c.h.bf16 %v478
    %v527 = vld [vmem:[#allocation2] sm:$0xff]
    %v528 = vld [vmem:[#allocation2 + $0x8] sm:$0xff]
    %v529 = vld [vmem:[#allocation2 + $0x10] sm:$0xff]
    %v530 = vadd.f32 %v479, %v491
    %v531 = vrot.slane %v530, 4
    %v532 = vadd.f32 %v530, %v531
    %v533 = vrot.slane %v532, 2
    %v534 = vadd.f32 %v532, %v533
    %v535 = vrot.slane %v534, 1
    %v536 = vadd.f32 %v534, %v535
    %v537 = vadd.f32 %v480, %v492
    %v538 = vrot.slane %v537, 4
    %v539 = vadd.f32 %v537, %v538
    %v540 = vrot.slane %v539, 2
    %v541 = vadd.f32 %v539, %v540
    %v542 = vrot.slane %v541, 1
    %v543 = vadd.f32 %v541, %v542
    %v544 = vadd.f32 %v481, %v493
    %v545 = vrot.slane %v544, 4
    %v546 = vadd.f32 %v544, %v545
    %v547 = vrot.slane %v546, 2
    %v548 = vadd.f32 %v546, %v547
    %v549 = vrot.slane %v548, 1
    %v550 = vadd.f32 %v548, %v549
    %v551 = vadd.f32 %v482, %v494
    %v552 = vrot.slane %v551, 4
    %v553 = vadd.f32 %v551, %v552
    %v554 = vrot.slane %v553, 2
    %v555 = vadd.f32 %v553, %v554
    %v556 = vrot.slane %v555, 1
    %v557 = vadd.f32 %v555, %v556
    %v558 = vadd.f32 %v483, %v495
    %v559 = vrot.slane %v558, 4
    %v560 = vadd.f32 %v558, %v559
    %v561 = vrot.slane %v560, 2
    %v562 = vadd.f32 %v560, %v561
    %v563 = vrot.slane %v562, 1
    %v564 = vadd.f32 %v562, %v563
    %v565 = vadd.f32 %v484, %v496
    %v566 = vrot.slane %v565, 4
    %v567 = vadd.f32 %v565, %v566
    %v568 = vrot.slane %v567, 2
    %v569 = vadd.f32 %v567, %v568
    %v570 = vrot.slane %v569, 1
    %v571 = vadd.f32 %v569, %v570
    %v572 = vadd.f32 %v485, %v497
    %v573 = vrot.slane %v572, 4
    %v574 = vadd.f32 %v572, %v573
    %v575 = vrot.slane %v574, 2
    %v576 = vadd.f32 %v574, %v575
    %v577 = vrot.slane %v576, 1
    %v578 = vadd.f32 %v576, %v577
    %v579 = vadd.f32 %v486, %v498
    %v580 = vrot.slane %v579, 4
    %v581 = vadd.f32 %v579, %v580
    %v582 = vrot.slane %v581, 2
    %v583 = vadd.f32 %v581, %v582
    %v584 = vrot.slane %v583, 1
    %v585 = vadd.f32 %v583, %v584
    %v586 = vadd.f32 %v487, %v499
    %v587 = vrot.slane %v586, 4
    %v588 = vadd.f32 %v586, %v587
    %v589 = vrot.slane %v588, 2
    %v590 = vadd.f32 %v588, %v589
    %v591 = vrot.slane %v590, 1
    %v592 = vadd.f32 %v590, %v591
    %v593 = vadd.f32 %v488, %v500
    %v594 = vrot.slane %v593, 4
    %v595 = vadd.f32 %v593, %v594
    %v596 = vrot.slane %v595, 2
    %v597 = vadd.f32 %v595, %v596
    %v598 = vrot.slane %v597, 1
    %v599 = vadd.f32 %v597, %v598
    %v600 = vadd.f32 %v489, %v501
    %v601 = vrot.slane %v600, 4
    %v602 = vadd.f32 %v600, %v601
    %v603 = vrot.slane %v602, 2
    %v604 = vadd.f32 %v602, %v603
    %v605 = vrot.slane %v604, 1
    %v606 = vadd.f32 %v604, %v605
    %v607 = vadd.f32 %v490, %v502
    %v608 = vrot.slane %v607, 4
    %v609 = vadd.f32 %v607, %v608
    %v610 = vrot.slane %v609, 2
    %v611 = vadd.f32 %v609, %v610
    %v612 = vrot.slane %v611, 1
    %v613 = vadd.f32 %v611, %v612
    %v614 = vadd.f32 %v503, %v515
    %v615 = vrot.slane %v614, 4
    %v616 = vadd.f32 %v614, %v615
    %v617 = vrot.slane %v616, 2
    %v618 = vadd.f32 %v616, %v617
    %v619 = vrot.slane %v618, 1
    %v620 = vadd.f32 %v618, %v619
    %v621 = vadd.f32 %v504, %v516
    %v622 = vrot.slane %v621, 4
    %v623 = vadd.f32 %v621, %v622
    %v624 = vrot.slane %v623, 2
    %v625 = vadd.f32 %v623, %v624
    %v626 = vrot.slane %v625, 1
    %v627 = vadd.f32 %v625, %v626
    %v628 = vadd.f32 %v505, %v517
    %v629 = vrot.slane %v628, 4
    %v630 = vadd.f32 %v628, %v629
    %v631 = vrot.slane %v630, 2
    %v632 = vadd.f32 %v630, %v631
    %v633 = vrot.slane %v632, 1
    %v634 = vadd.f32 %v632, %v633
    %v635 = vadd.f32 %v506, %v518
    %v636 = vrot.slane %v635, 4
    %v637 = vadd.f32 %v635, %v636
    %v638 = vrot.slane %v637, 2
    %v639 = vadd.f32 %v637, %v638
    %v640 = vrot.slane %v639, 1
    %v641 = vadd.f32 %v639, %v640
    %v642 = vadd.f32 %v507, %v519
    %v643 = vrot.slane %v642, 4
    %v644 = vadd.f32 %v642, %v643
    %v645 = vrot.slane %v644, 2
    %v646 = vadd.f32 %v644, %v645
    %v647 = vrot.slane %v646, 1
    %v648 = vadd.f32 %v646, %v647
    %v649 = vadd.f32 %v508, %v520
    %v650 = vrot.slane %v649, 4
    %v651 = vadd.f32 %v649, %v650
    %v652 = vrot.slane %v651, 2
    %v653 = vadd.f32 %v651, %v652
    %v654 = vrot.slane %v653, 1
    %v655 = vadd.f32 %v653, %v654
    %v656 = vadd.f32 %v509, %v521
    %v657 = vrot.slane %v656, 4
    %v658 = vadd.f32 %v656, %v657
    %v659 = vrot.slane %v658, 2
    %v660 = vadd.f32 %v658, %v659
    %v661 = vrot.slane %v660, 1
    %v662 = vadd.f32 %v660, %v661
    %v663 = vadd.f32 %v510, %v522
    %v664 = vrot.slane %v663, 4
    %v665 = vadd.f32 %v663, %v664
    %v666 = vrot.slane %v665, 2
    %v667 = vadd.f32 %v665, %v666
    %v668 = vrot.slane %v667, 1
    %v669 = vadd.f32 %v667, %v668
    %v670 = vadd.f32 %v511, %v523
    %v671 = vrot.slane %v670, 4
    %v672 = vadd.f32 %v670, %v671
    %v673 = vrot.slane %v672, 2
    %v674 = vadd.f32 %v672, %v673
    %v675 = vrot.slane %v674, 1
    %v676 = vadd.f32 %v674, %v675
    %v677 = vadd.f32 %v512, %v524
    %v678 = vrot.slane %v677, 4
    %v679 = vadd.f32 %v677, %v678
    %v680 = vrot.slane %v679, 2
    %v681 = vadd.f32 %v679, %v680
    %v682 = vrot.slane %v681, 1
    %v683 = vadd.f32 %v681, %v682
    %v684 = vadd.f32 %v513, %v525
    %v685 = vrot.slane %v684, 4
    %v686 = vadd.f32 %v684, %v685
    %v687 = vrot.slane %v686, 2
    %v688 = vadd.f32 %v686, %v687
    %v689 = vrot.slane %v688, 1
    %v690 = vadd.f32 %v688, %v689
    %v691 = vadd.f32 %v514, %v526
    %v692 = vrot.slane %v691, 4
    %v693 = vadd.f32 %v691, %v692
    %v694 = vrot.slane %v693, 2
    %v695 = vadd.f32 %v693, %v694
    %v696 = vrot.slane %v695, 1
    %v697 = vadd.f32 %v695, %v696
    %v722 = vcombine.low %v536, %v543
    %v723 = vcombine.low %v550, %v557
    %v725 = vunpack.c.l.s4 1983009808
    %v726 = vunpack.c.0.s8 %v725
    %v727 = vlaneseq
    %v728 = vshrl.u32 %v727, 7
    %v729 = vsub.s32 %v726, %v728
    %v730 = vrot.slane %v722, %v729
    %v732 = vunpack.c.l.s4 1983009808
    %v733 = vunpack.c.0.s8 %v732
    %v734 = vlaneseq
    %v735 = vshrl.u32 %v734, 7
    %v736 = vsub.s32 %v733, %v735
    %v737 = vrot.slane %v723, %v736
    %v738 = vcombine.low %v730, %v737
    %v739 = vcombine.low %v564, %v571
    %v740 = vcombine.low %v578, %v585
    %v742 = vunpack.c.l.s4 1983009808
    %v743 = vunpack.c.0.s8 %v742
    %v744 = vlaneseq
    %v745 = vshrl.u32 %v744, 7
    %v746 = vsub.s32 %v743, %v745
    %v747 = vrot.slane %v739, %v746
    %v749 = vunpack.c.l.s4 1983009808
    %v750 = vunpack.c.0.s8 %v749
    %v751 = vlaneseq
    %v752 = vshrl.u32 %v751, 7
    %v753 = vsub.s32 %v750, %v752
    %v754 = vrot.slane %v740, %v753
    %v755 = vcombine.low %v747, %v754
    %v756 = vcombine.low %v592, %v599
    %v757 = vcombine.low %v606, %v613
    %v759 = vunpack.c.l.s4 1983009808
    %v760 = vunpack.c.0.s8 %v759
    %v761 = vlaneseq
    %v762 = vshrl.u32 %v761, 7
    %v763 = vsub.s32 %v760, %v762
    %v764 = vrot.slane %v756, %v763
    %v766 = vunpack.c.l.s4 1983009808
    %v767 = vunpack.c.0.s8 %v766
    %v768 = vlaneseq
    %v769 = vshrl.u32 %v768, 7
    %v770 = vsub.s32 %v767, %v769
    %v771 = vrot.slane %v757, %v770
    %v772 = vcombine.low %v764, %v771
    %v773 = vcombine.low %v620, %v627
    %v774 = vcombine.low %v634, %v641
    %v776 = vunpack.c.l.s4 1983009808
    %v777 = vunpack.c.0.s8 %v776
    %v778 = vlaneseq
    %v779 = vshrl.u32 %v778, 7
    %v780 = vsub.s32 %v777, %v779
    %v781 = vrot.slane %v773, %v780
    %v783 = vunpack.c.l.s4 1983009808
    %v784 = vunpack.c.0.s8 %v783
    %v785 = vlaneseq
    %v786 = vshrl.u32 %v785, 7
    %v787 = vsub.s32 %v784, %v786
    %v788 = vrot.slane %v774, %v787
    %v789 = vcombine.low %v781, %v788
    %v790 = vcombine.low %v648, %v655
    %v791 = vcombine.low %v662, %v669
    %v793 = vunpack.c.l.s4 1983009808
    %v794 = vunpack.c.0.s8 %v793
    %v795 = vlaneseq
    %v796 = vshrl.u32 %v795, 7
    %v797 = vsub.s32 %v794, %v796
    %v798 = vrot.slane %v790, %v797
    %v800 = vunpack.c.l.s4 1983009808
    %v801 = vunpack.c.0.s8 %v800
    %v802 = vlaneseq
    %v803 = vshrl.u32 %v802, 7
    %v804 = vsub.s32 %v801, %v803
    %v805 = vrot.slane %v791, %v804
    %v806 = vcombine.low %v798, %v805
    %v807 = vcombine.low %v676, %v683
    %v808 = vcombine.low %v690, %v697
    %v810 = vunpack.c.l.s4 1983009808
    %v811 = vunpack.c.0.s8 %v810
    %v812 = vlaneseq
    %v813 = vshrl.u32 %v812, 7
    %v814 = vsub.s32 %v811, %v813
    %v815 = vrot.slane %v807, %v814
    %v817 = vunpack.c.l.s4 1983009808
    %v818 = vunpack.c.0.s8 %v817
    %v819 = vlaneseq
    %v820 = vshrl.u32 %v819, 7
    %v821 = vsub.s32 %v818, %v820
    %v822 = vrot.slane %v808, %v821
    %v823 = vcombine.low %v815, %v822
    %v824 = vsel %vm416, %v738, %v738
    %v825 = vsel %vm418, %v738, %v824
    %v826 = vrot.slane %v789, 7
    %v827 = vsel %vm421, %v826, %v825
    %v828 = vsel %vm423, %v826, %v827
    %v829 = vsel %vm425, %v826, %v828
    %v830 = vsel %vm427, %v826, %v829
    %v831 = vsel %vm416, %v755, %v755
    %v832 = vsel %vm418, %v755, %v831
    %v833 = vrot.slane %v806, 7
    %v834 = vsel %vm421, %v833, %v832
    %v835 = vsel %vm423, %v833, %v834
    %v836 = vsel %vm425, %v833, %v835
    %v837 = vsel %vm427, %v833, %v836
    %v838 = vsel %vm416, %v772, %v772
    %v839 = vsel %vm418, %v772, %v838
    %v840 = vrot.slane %v823, 7
    %v841 = vsel %vm421, %v840, %v839
    %v842 = vsel %vm423, %v840, %v841
    %v843 = vsel %vm425, %v840, %v842
    %v844 = vsel %vm427, %v840, %v843
    %v848 = vadd.f32 %v527, %v830
    %v849 = vadd.f32 %v528, %v837
    %v850 = vadd.f32 %v529, %v844
    %851 = vst [vmem:[#allocation2] sm:$0xff] %v848
    %852 = vst [vmem:[#allocation2 + $0x8] sm:$0xff] %v849
    %853 = vst [vmem:[#allocation2 + $0x10] sm:$0xff] %v850
    %s854 = smul.u32 4, 12
    %s855 = smul.addr %s854, 4
    %s856 = scalar_lea.vmem [#allocation4], %s855
    %v857 = vld [vmem:[%s856] sm:$0xff]
    %v858 = vld [vmem:[%s856 + $0x8] sm:$0xff]
    %v859 = vld [vmem:[%s856 + $0x10] sm:$0xff]
    %v860 = vld [vmem:[%s856 + $0x18] sm:$0xff]
    %v861 = vld [vmem:[%s856 + $0x20] sm:$0xff]
    %v862 = vld [vmem:[%s856 + $0x28] sm:$0xff]
    %v863 = vld [vmem:[%s856 + $0x30] sm:$0xff]
    %v864 = vld [vmem:[%s856 + $0x38] sm:$0xff]
    %v865 = vld [vmem:[%s856 + $0x40] sm:$0xff]
    %v866 = vld [vmem:[%s856 + $0x48] sm:$0xff]
    %v867 = vld [vmem:[%s856 + $0x50] sm:$0xff]
    %v868 = vld [vmem:[%s856 + $0x58] sm:$0xff]
    %v869 = vld [vmem:[%s856 + $0x180] sm:$0xff]
    %v870 = vld [vmem:[%s856 + $0x188] sm:$0xff]
    %v871 = vld [vmem:[%s856 + $0x190] sm:$0xff]
    %v872 = vld [vmem:[%s856 + $0x198] sm:$0xff]
    %v873 = vld [vmem:[%s856 + $0x1a0] sm:$0xff]
    %v874 = vld [vmem:[%s856 + $0x1a8] sm:$0xff]
    %v875 = vld [vmem:[%s856 + $0x1b0] sm:$0xff]
    %v876 = vld [vmem:[%s856 + $0x1b8] sm:$0xff]
    %v877 = vld [vmem:[%s856 + $0x1c0] sm:$0xff]
    %v878 = vld [vmem:[%s856 + $0x1c8] sm:$0xff]
    %v879 = vld [vmem:[%s856 + $0x1d0] sm:$0xff]
    %v880 = vld [vmem:[%s856 + $0x1d8] sm:$0xff]
    %v881 = vunpack.c.l.bf16 %v857
    %v882 = vunpack.c.h.bf16 %v857
    %v883 = vunpack.c.l.bf16 %v858
    %v884 = vunpack.c.h.bf16 %v858
    %v885 = vunpack.c.l.bf16 %v859
    %v886 = vunpack.c.h.bf16 %v859
    %v887 = vunpack.c.l.bf16 %v860
    %v888 = vunpack.c.h.bf16 %v860
    %v889 = vunpack.c.l.bf16 %v861
    %v890 = vunpack.c.h.bf16 %v861
    %v891 = vunpack.c.l.bf16 %v862
    %v892 = vunpack.c.h.bf16 %v862
    %v893 = vunpack.c.l.bf16 %v863
    %v894 = vunpack.c.h.bf16 %v863
    %v895 = vunpack.c.l.bf16 %v864
    %v896 = vunpack.c.h.bf16 %v864
    %v897 = vunpack.c.l.bf16 %v865
    %v898 = vunpack.c.h.bf16 %v865
    %v899 = vunpack.c.l.bf16 %v866
    %v900 = vunpack.c.h.bf16 %v866
    %v901 = vunpack.c.l.bf16 %v867
    %v902 = vunpack.c.h.bf16 %v867
    %v903 = vunpack.c.l.bf16 %v868
    %v904 = vunpack.c.h.bf16 %v868
    %v905 = vunpack.c.l.bf16 %v869
    %v906 = vunpack.c.h.bf16 %v869
    %v907 = vunpack.c.l.bf16 %v870
    %v908 = vunpack.c.h.bf16 %v870
    %v909 = vunpack.c.l.bf16 %v871
    %v910 = vunpack.c.h.bf16 %v871
    %v911 = vunpack.c.l.bf16 %v872
    %v912 = vunpack.c.h.bf16 %v872
    %v913 = vunpack.c.l.bf16 %v873
    %v914 = vunpack.c.h.bf16 %v873
    %v915 = vunpack.c.l.bf16 %v874
    %v916 = vunpack.c.h.bf16 %v874
    %v917 = vunpack.c.l.bf16 %v875
    %v918 = vunpack.c.h.bf16 %v875
    %v919 = vunpack.c.l.bf16 %v876
    %v920 = vunpack.c.h.bf16 %v876
    %v921 = vunpack.c.l.bf16 %v877
    %v922 = vunpack.c.h.bf16 %v877
    %v923 = vunpack.c.l.bf16 %v878
    %v924 = vunpack.c.h.bf16 %v878
    %v925 = vunpack.c.l.bf16 %v879
    %v926 = vunpack.c.h.bf16 %v879
    %v927 = vunpack.c.l.bf16 %v880
    %v928 = vunpack.c.h.bf16 %v880
    %v929 = vld [vmem:[#allocation2] sm:$0xff]
    %v930 = vld [vmem:[#allocation2 + $0x8] sm:$0xff]
    %v931 = vld [vmem:[#allocation2 + $0x10] sm:$0xff]
    %v932 = vadd.f32 %v881, %v893
    %v933 = vrot.slane %v932, 4
    %v934 = vadd.f32 %v932, %v933
    %v935 = vrot.slane %v934, 2
    %v936 = vadd.f32 %v934, %v935
    %v937 = vrot.slane %v936, 1
    %v938 = vadd.f32 %v936, %v937
    %v939 = vadd.f32 %v882, %v894
    %v940 = vrot.slane %v939, 4
    %v941 = vadd.f32 %v939, %v940
    %v942 = vrot.slane %v941, 2
    %v943 = vadd.f32 %v941, %v942
    %v944 = vrot.slane %v943, 1
    %v945 = vadd.f32 %v943, %v944
    %v946 = vadd.f32 %v883, %v895
    %v947 = vrot.slane %v946, 4
    %v948 = vadd.f32 %v946, %v947
    %v949 = vrot.slane %v948, 2
    %v950 = vadd.f32 %v948, %v949
    %v951 = vrot.slane %v950, 1
    %v952 = vadd.f32 %v950, %v951
    %v953 = vadd.f32 %v884, %v896
    %v954 = vrot.slane %v953, 4
    %v955 = vadd.f32 %v953, %v954
    %v956 = vrot.slane %v955, 2
    %v957 = vadd.f32 %v955, %v956
    %v958 = vrot.slane %v957, 1
    %v959 = vadd.f32 %v957, %v958
    %v960 = vadd.f32 %v885, %v897
    %v961 = vrot.slane %v960, 4
    %v962 = vadd.f32 %v960, %v961
    %v963 = vrot.slane %v962, 2
    %v964 = vadd.f32 %v962, %v963
    %v965 = vrot.slane %v964, 1
    %v966 = vadd.f32 %v964, %v965
    %v967 = vadd.f32 %v886, %v898
    %v968 = vrot.slane %v967, 4
    %v969 = vadd.f32 %v967, %v968
    %v970 = vrot.slane %v969, 2
    %v971 = vadd.f32 %v969, %v970
    %v972 = vrot.slane %v971, 1
    %v973 = vadd.f32 %v971, %v972
    %v974 = vadd.f32 %v887, %v899
    %v975 = vrot.slane %v974, 4
    %v976 = vadd.f32 %v974, %v975
    %v977 = vrot.slane %v976, 2
    %v978 = vadd.f32 %v976, %v977
    %v979 = vrot.slane %v978, 1
    %v980 = vadd.f32 %v978, %v979
    %v981 = vadd.f32 %v888, %v900
    %v982 = vrot.slane %v981, 4
    %v983 = vadd.f32 %v981, %v982
    %v984 = vrot.slane %v983, 2
    %v985 = vadd.f32 %v983, %v984
    %v986 = vrot.slane %v985, 1
    %v987 = vadd.f32 %v985, %v986
    %v988 = vadd.f32 %v889, %v901
    %v989 = vrot.slane %v988, 4
    %v990 = vadd.f32 %v988, %v989
    %v991 = vrot.slane %v990, 2
    %v992 = vadd.f32 %v990, %v991
    %v993 = vrot.slane %v992, 1
    %v994 = vadd.f32 %v992, %v993
    %v995 = vadd.f32 %v890, %v902
    %v996 = vrot.slane %v995, 4
    %v997 = vadd.f32 %v995, %v996
    %v998 = vrot.slane %v997, 2
    %v999 = vadd.f32 %v997, %v998
    %v1000 = vrot.slane %v999, 1
    %v1001 = vadd.f32 %v999, %v1000
    %v1002 = vadd.f32 %v891, %v903
    %v1003 = vrot.slane %v1002, 4
    %v1004 = vadd.f32 %v1002, %v1003
    %v1005 = vrot.slane %v1004, 2
    %v1006 = vadd.f32 %v1004, %v1005
    %v1007 = vrot.slane %v1006, 1
    %v1008 = vadd.f32 %v1006, %v1007
    %v1009 = vadd.f32 %v892, %v904
    %v1010 = vrot.slane %v1009, 4
    %v1011 = vadd.f32 %v1009, %v1010
    %v1012 = vrot.slane %v1011, 2
    %v1013 = vadd.f32 %v1011, %v1012
    %v1014 = vrot.slane %v1013, 1
    %v1015 = vadd.f32 %v1013, %v1014
    %v1016 = vadd.f32 %v905, %v917
    %v1017 = vrot.slane %v1016, 4
    %v1018 = vadd.f32 %v1016, %v1017
    %v1019 = vrot.slane %v1018, 2
    %v1020 = vadd.f32 %v1018, %v1019
    %v1021 = vrot.slane %v1020, 1
    %v1022 = vadd.f32 %v1020, %v1021
    %v1023 = vadd.f32 %v906, %v918
    %v1024 = vrot.slane %v1023, 4
    %v1025 = vadd.f32 %v1023, %v1024
    %v1026 = vrot.slane %v1025, 2
    %v1027 = vadd.f32 %v1025, %v1026
    %v1028 = vrot.slane %v1027, 1
    %v1029 = vadd.f32 %v1027, %v1028
    %v1030 = vadd.f32 %v907, %v919
    %v1031 = vrot.slane %v1030, 4
    %v1032 = vadd.f32 %v1030, %v1031
    %v1033 = vrot.slane %v1032, 2
    %v1034 = vadd.f32 %v1032, %v1033
    %v1035 = vrot.slane %v1034, 1
    %v1036 = vadd.f32 %v1034, %v1035
    %v1037 = vadd.f32 %v908, %v920
    %v1038 = vrot.slane %v1037, 4
    %v1039 = vadd.f32 %v1037, %v1038
    %v1040 = vrot.slane %v1039, 2
    %v1041 = vadd.f32 %v1039, %v1040
    %v1042 = vrot.slane %v1041, 1
    %v1043 = vadd.f32 %v1041, %v1042
    %v1044 = vadd.f32 %v909, %v921
    %v1045 = vrot.slane %v1044, 4
    %v1046 = vadd.f32 %v1044, %v1045
    %v1047 = vrot.slane %v1046, 2
    %v1048 = vadd.f32 %v1046, %v1047
    %v1049 = vrot.slane %v1048, 1
    %v1050 = vadd.f32 %v1048, %v1049
    %v1051 = vadd.f32 %v910, %v922
    %v1052 = vrot.slane %v1051, 4
    %v1053 = vadd.f32 %v1051, %v1052
    %v1054 = vrot.slane %v1053, 2
    %v1055 = vadd.f32 %v1053, %v1054
    %v1056 = vrot.slane %v1055, 1
    %v1057 = vadd.f32 %v1055, %v1056
    %v1058 = vadd.f32 %v911, %v923
    %v1059 = vrot.slane %v1058, 4
    %v1060 = vadd.f32 %v1058, %v1059
    %v1061 = vrot.slane %v1060, 2
    %v1062 = vadd.f32 %v1060, %v1061
    %v1063 = vrot.slane %v1062, 1
    %v1064 = vadd.f32 %v1062, %v1063
    %v1065 = vadd.f32 %v912, %v924
    %v1066 = vrot.slane %v1065, 4
    %v1067 = vadd.f32 %v1065, %v1066
    %v1068 = vrot.slane %v1067, 2
    %v1069 = vadd.f32 %v1067, %v1068
    %v1070 = vrot.slane %v1069, 1
    %v1071 = vadd.f32 %v1069, %v1070
    %v1072 = vadd.f32 %v913, %v925
    %v1073 = vrot.slane %v1072, 4
    %v1074 = vadd.f32 %v1072, %v1073
    %v1075 = vrot.slane %v1074, 2
    %v1076 = vadd.f32 %v1074, %v1075
    %v1077 = vrot.slane %v1076, 1
    %v1078 = vadd.f32 %v1076, %v1077
    %v1079 = vadd.f32 %v914, %v926
    %v1080 = vrot.slane %v1079, 4
    %v1081 = vadd.f32 %v1079, %v1080
    %v1082 = vrot.slane %v1081, 2
    %v1083 = vadd.f32 %v1081, %v1082
    %v1084 = vrot.slane %v1083, 1
    %v1085 = vadd.f32 %v1083, %v1084
    %v1086 = vadd.f32 %v915, %v927
    %v1087 = vrot.slane %v1086, 4
    %v1088 = vadd.f32 %v1086, %v1087
    %v1089 = vrot.slane %v1088, 2
    %v1090 = vadd.f32 %v1088, %v1089
    %v1091 = vrot.slane %v1090, 1
    %v1092 = vadd.f32 %v1090, %v1091
    %v1093 = vadd.f32 %v916, %v928
    %v1094 = vrot.slane %v1093, 4
    %v1095 = vadd.f32 %v1093, %v1094
    %v1096 = vrot.slane %v1095, 2
    %v1097 = vadd.f32 %v1095, %v1096
    %v1098 = vrot.slane %v1097, 1
    %v1099 = vadd.f32 %v1097, %v1098
    %v1124 = vcombine.low %v938, %v945
    %v1125 = vcombine.low %v952, %v959
    %v1127 = vunpack.c.l.s4 1983009808
    %v1128 = vunpack.c.0.s8 %v1127
    %v1129 = vlaneseq
    %v1130 = vshrl.u32 %v1129, 7
    %v1131 = vsub.s32 %v1128, %v1130
    %v1132 = vrot.slane %v1124, %v1131
    %v1134 = vunpack.c.l.s4 1983009808
    %v1135 = vunpack.c.0.s8 %v1134
    %v1136 = vlaneseq
    %v1137 = vshrl.u32 %v1136, 7
    %v1138 = vsub.s32 %v1135, %v1137
    %v1139 = vrot.slane %v1125, %v1138
    %v1140 = vcombine.low %v1132, %v1139
    %v1141 = vcombine.low %v966, %v973
    %v1142 = vcombine.low %v980, %v987
    %v1144 = vunpack.c.l.s4 1983009808
    %v1145 = vunpack.c.0.s8 %v1144
    %v1146 = vlaneseq
    %v1147 = vshrl.u32 %v1146, 7
    %v1148 = vsub.s32 %v1145, %v1147
    %v1149 = vrot.slane %v1141, %v1148
    %v1151 = vunpack.c.l.s4 1983009808
    %v1152 = vunpack.c.0.s8 %v1151
    %v1153 = vlaneseq
    %v1154 = vshrl.u32 %v1153, 7
    %v1155 = vsub.s32 %v1152, %v1154
    %v1156 = vrot.slane %v1142, %v1155
    %v1157 = vcombine.low %v1149, %v1156
    %v1158 = vcombine.low %v994, %v1001
    %v1159 = vcombine.low %v1008, %v1015
    %v1161 = vunpack.c.l.s4 1983009808
    %v1162 = vunpack.c.0.s8 %v1161
    %v1163 = vlaneseq
    %v1164 = vshrl.u32 %v1163, 7
    %v1165 = vsub.s32 %v1162, %v1164
    %v1166 = vrot.slane %v1158, %v1165
    %v1168 = vunpack.c.l.s4 1983009808
    %v1169 = vunpack.c.0.s8 %v1168
    %v1170 = vlaneseq
    %v1171 = vshrl.u32 %v1170, 7
    %v1172 = vsub.s32 %v1169, %v1171
    %v1173 = vrot.slane %v1159, %v1172
    %v1174 = vcombine.low %v1166, %v1173
    %v1175 = vcombine.low %v1022, %v1029
    %v1176 = vcombine.low %v1036, %v1043
    %v1178 = vunpack.c.l.s4 1983009808
    %v1179 = vunpack.c.0.s8 %v1178
    %v1180 = vlaneseq
    %v1181 = vshrl.u32 %v1180, 7
    %v1182 = vsub.s32 %v1179, %v1181
    %v1183 = vrot.slane %v1175, %v1182
    %v1185 = vunpack.c.l.s4 1983009808
    %v1186 = vunpack.c.0.s8 %v1185
    %v1187 = vlaneseq
    %v1188 = vshrl.u32 %v1187, 7
    %v1189 = vsub.s32 %v1186, %v1188
    %v1190 = vrot.slane %v1176, %v1189
    %v1191 = vcombine.low %v1183, %v1190
    %v1192 = vcombine.low %v1050, %v1057
    %v1193 = vcombine.low %v1064, %v1071
    %v1195 = vunpack.c.l.s4 1983009808
    %v1196 = vunpack.c.0.s8 %v1195
    %v1197 = vlaneseq
    %v1198 = vshrl.u32 %v1197, 7
    %v1199 = vsub.s32 %v1196, %v1198
    %v1200 = vrot.slane %v1192, %v1199
    %v1202 = vunpack.c.l.s4 1983009808
    %v1203 = vunpack.c.0.s8 %v1202
    %v1204 = vlaneseq
    %v1205 = vshrl.u32 %v1204, 7
    %v1206 = vsub.s32 %v1203, %v1205
    %v1207 = vrot.slane %v1193, %v1206
    %v1208 = vcombine.low %v1200, %v1207
    %v1209 = vcombine.low %v1078, %v1085
    %v1210 = vcombine.low %v1092, %v1099
    %v1212 = vunpack.c.l.s4 1983009808
    %v1213 = vunpack.c.0.s8 %v1212
    %v1214 = vlaneseq
    %v1215 = vshrl.u32 %v1214, 7
    %v1216 = vsub.s32 %v1213, %v1215
    %v1217 = vrot.slane %v1209, %v1216
    %v1219 = vunpack.c.l.s4 1983009808
    %v1220 = vunpack.c.0.s8 %v1219
    %v1221 = vlaneseq
    %v1222 = vshrl.u32 %v1221, 7
    %v1223 = vsub.s32 %v1220, %v1222
    %v1224 = vrot.slane %v1210, %v1223
    %v1225 = vcombine.low %v1217, %v1224
    %v1226 = vsel %vm416, %v1140, %v1140
    %v1227 = vsel %vm418, %v1140, %v1226
    %v1228 = vrot.slane %v1191, 7
    %v1229 = vsel %vm421, %v1228, %v1227
    %v1230 = vsel %vm423, %v1228, %v1229
    %v1231 = vsel %vm425, %v1228, %v1230
    %v1232 = vsel %vm427, %v1228, %v1231
    %v1233 = vsel %vm416, %v1157, %v1157
    %v1234 = vsel %vm418, %v1157, %v1233
    %v1235 = vrot.slane %v1208, 7
    %v1236 = vsel %vm421, %v1235, %v1234
    %v1237 = vsel %vm423, %v1235, %v1236
    %v1238 = vsel %vm425, %v1235, %v1237
    %v1239 = vsel %vm427, %v1235, %v1238
    %v1240 = vsel %vm416, %v1174, %v1174
    %v1241 = vsel %vm418, %v1174, %v1240
    %v1242 = vrot.slane %v1225, 7
    %v1243 = vsel %vm421, %v1242, %v1241
    %v1244 = vsel %vm423, %v1242, %v1243
    %v1245 = vsel %vm425, %v1242, %v1244
    %v1246 = vsel %vm427, %v1242, %v1245
    %v1250 = vadd.f32 %v929, %v1232
    %v1251 = vadd.f32 %v930, %v1239
    %v1252 = vadd.f32 %v931, %v1246
    %1253 = vst [vmem:[#allocation2] sm:$0xff] %v1250
    %1254 = vst [vmem:[#allocation2 + $0x8] sm:$0xff] %v1251
    %1255 = vst [vmem:[#allocation2 + $0x10] sm:$0xff] %v1252
    %s1256 = smul.u32 6, 12
    %s1257 = smul.addr %s1256, 4
    %s1258 = scalar_lea.vmem [#allocation4], %s1257
    %v1259 = vld [vmem:[%s1258] sm:$0xff]
    %v1260 = vld [vmem:[%s1258 + $0x8] sm:$0xff]
    %v1261 = vld [vmem:[%s1258 + $0x10] sm:$0xff]
    %v1262 = vld [vmem:[%s1258 + $0x18] sm:$0xff]
    %v1263 = vld [vmem:[%s1258 + $0x20] sm:$0xff]
    %v1264 = vld [vmem:[%s1258 + $0x28] sm:$0xff]
    %v1265 = vld [vmem:[%s1258 + $0x30] sm:$0xff]
    %v1266 = vld [vmem:[%s1258 + $0x38] sm:$0xff]
    %v1267 = vld [vmem:[%s1258 + $0x40] sm:$0xff]
    %v1268 = vld [vmem:[%s1258 + $0x48] sm:$0xff]
    %v1269 = vld [vmem:[%s1258 + $0x50] sm:$0xff]
    %v1270 = vld [vmem:[%s1258 + $0x58] sm:$0xff]
    %v1271 = vld [vmem:[%s1258 + $0x180] sm:$0xff]
    %v1272 = vld [vmem:[%s1258 + $0x188] sm:$0xff]
    %v1273 = vld [vmem:[%s1258 + $0x190] sm:$0xff]
    %v1274 = vld [vmem:[%s1258 + $0x198] sm:$0xff]
    %v1275 = vld [vmem:[%s1258 + $0x1a0] sm:$0xff]
    %v1276 = vld [vmem:[%s1258 + $0x1a8] sm:$0xff]
    %v1277 = vld [vmem:[%s1258 + $0x1b0] sm:$0xff]
    %v1278 = vld [vmem:[%s1258 + $0x1b8] sm:$0xff]
    %v1279 = vld [vmem:[%s1258 + $0x1c0] sm:$0xff]
    %v1280 = vld [vmem:[%s1258 + $0x1c8] sm:$0xff]
    %v1281 = vld [vmem:[%s1258 + $0x1d0] sm:$0xff]
    %v1282 = vld [vmem:[%s1258 + $0x1d8] sm:$0xff]
    %v1283 = vunpack.c.l.bf16 %v1259
    %v1284 = vunpack.c.h.bf16 %v1259
    %v1285 = vunpack.c.l.bf16 %v1260
    %v1286 = vunpack.c.h.bf16 %v1260
    %v1287 = vunpack.c.l.bf16 %v1261
    %v1288 = vunpack.c.h.bf16 %v1261
    %v1289 = vunpack.c.l.bf16 %v1262
    %v1290 = vunpack.c.h.bf16 %v1262
    %v1291 = vunpack.c.l.bf16 %v1263
    %v1292 = vunpack.c.h.bf16 %v1263
    %v1293 = vunpack.c.l.bf16 %v1264
    %v1294 = vunpack.c.h.bf16 %v1264
    %v1295 = vunpack.c.l.bf16 %v1265
    %v1296 = vunpack.c.h.bf16 %v1265
    %v1297 = vunpack.c.l.bf16 %v1266
    %v1298 = vunpack.c.h.bf16 %v1266
    %v1299 = vunpack.c.l.bf16 %v1267
    %v1300 = vunpack.c.h.bf16 %v1267
    %v1301 = vunpack.c.l.bf16 %v1268
    %v1302 = vunpack.c.h.bf16 %v1268
    %v1303 = vunpack.c.l.bf16 %v1269
    %v1304 = vunpack.c.h.bf16 %v1269
    %v1305 = vunpack.c.l.bf16 %v1270
    %v1306 = vunpack.c.h.bf16 %v1270
    %v1307 = vunpack.c.l.bf16 %v1271
    %v1308 = vunpack.c.h.bf16 %v1271
    %v1309 = vunpack.c.l.bf16 %v1272
    %v1310 = vunpack.c.h.bf16 %v1272
    %v1311 = vunpack.c.l.bf16 %v1273
    %v1312 = vunpack.c.h.bf16 %v1273
    %v1313 = vunpack.c.l.bf16 %v1274
    %v1314 = vunpack.c.h.bf16 %v1274
    %v1315 = vunpack.c.l.bf16 %v1275
    %v1316 = vunpack.c.h.bf16 %v1275
    %v1317 = vunpack.c.l.bf16 %v1276
    %v1318 = vunpack.c.h.bf16 %v1276
    %v1319 = vunpack.c.l.bf16 %v1277
    %v1320 = vunpack.c.h.bf16 %v1277
    %v1321 = vunpack.c.l.bf16 %v1278
    %v1322 = vunpack.c.h.bf16 %v1278
    %v1323 = vunpack.c.l.bf16 %v1279
    %v1324 = vunpack.c.h.bf16 %v1279
    %v1325 = vunpack.c.l.bf16 %v1280
    %v1326 = vunpack.c.h.bf16 %v1280
    %v1327 = vunpack.c.l.bf16 %v1281
    %v1328 = vunpack.c.h.bf16 %v1281
    %v1329 = vunpack.c.l.bf16 %v1282
    %v1330 = vunpack.c.h.bf16 %v1282
    %v1331 = vld [vmem:[#allocation2] sm:$0xff]
    %v1332 = vld [vmem:[#allocation2 + $0x8] sm:$0xff]
    %v1333 = vld [vmem:[#allocation2 + $0x10] sm:$0xff]
    %v1334 = vadd.f32 %v1283, %v1295
    %v1335 = vrot.slane %v1334, 4
    %v1336 = vadd.f32 %v1334, %v1335
    %v1337 = vrot.slane %v1336, 2
    %v1338 = vadd.f32 %v1336, %v1337
    %v1339 = vrot.slane %v1338, 1
    %v1340 = vadd.f32 %v1338, %v1339
    %v1341 = vadd.f32 %v1284, %v1296
    %v1342 = vrot.slane %v1341, 4
    %v1343 = vadd.f32 %v1341, %v1342
    %v1344 = vrot.slane %v1343, 2
    %v1345 = vadd.f32 %v1343, %v1344
    %v1346 = vrot.slane %v1345, 1
    %v1347 = vadd.f32 %v1345, %v1346
    %v1348 = vadd.f32 %v1285, %v1297
    %v1349 = vrot.slane %v1348, 4
    %v1350 = vadd.f32 %v1348, %v1349
    %v1351 = vrot.slane %v1350, 2
    %v1352 = vadd.f32 %v1350, %v1351
    %v1353 = vrot.slane %v1352, 1
    %v1354 = vadd.f32 %v1352, %v1353
    %v1355 = vadd.f32 %v1286, %v1298
    %v1356 = vrot.slane %v1355, 4
    %v1357 = vadd.f32 %v1355, %v1356
    %v1358 = vrot.slane %v1357, 2
    %v1359 = vadd.f32 %v1357, %v1358
    %v1360 = vrot.slane %v1359, 1
    %v1361 = vadd.f32 %v1359, %v1360
    %v1362 = vadd.f32 %v1287, %v1299
    %v1363 = vrot.slane %v1362, 4
    %v1364 = vadd.f32 %v1362, %v1363
    %v1365 = vrot.slane %v1364, 2
    %v1366 = vadd.f32 %v1364, %v1365
    %v1367 = vrot.slane %v1366, 1
    %v1368 = vadd.f32 %v1366, %v1367
    %v1369 = vadd.f32 %v1288, %v1300
    %v1370 = vrot.slane %v1369, 4
    %v1371 = vadd.f32 %v1369, %v1370
    %v1372 = vrot.slane %v1371, 2
    %v1373 = vadd.f32 %v1371, %v1372
    %v1374 = vrot.slane %v1373, 1
    %v1375 = vadd.f32 %v1373, %v1374
    %v1376 = vadd.f32 %v1289, %v1301
    %v1377 = vrot.slane %v1376, 4
    %v1378 = vadd.f32 %v1376, %v1377
    %v1379 = vrot.slane %v1378, 2
    %v1380 = vadd.f32 %v1378, %v1379
    %v1381 = vrot.slane %v1380, 1
    %v1382 = vadd.f32 %v1380, %v1381
    %v1383 = vadd.f32 %v1290, %v1302
    %v1384 = vrot.slane %v1383, 4
    %v1385 = vadd.f32 %v1383, %v1384
    %v1386 = vrot.slane %v1385, 2
    %v1387 = vadd.f32 %v1385, %v1386
    %v1388 = vrot.slane %v1387, 1
    %v1389 = vadd.f32 %v1387, %v1388
    %v1390 = vadd.f32 %v1291, %v1303
    %v1391 = vrot.slane %v1390, 4
    %v1392 = vadd.f32 %v1390, %v1391
    %v1393 = vrot.slane %v1392, 2
    %v1394 = vadd.f32 %v1392, %v1393
    %v1395 = vrot.slane %v1394, 1
    %v1396 = vadd.f32 %v1394, %v1395
    %v1397 = vadd.f32 %v1292, %v1304
    %v1398 = vrot.slane %v1397, 4
    %v1399 = vadd.f32 %v1397, %v1398
    %v1400 = vrot.slane %v1399, 2
    %v1401 = vadd.f32 %v1399, %v1400
    %v1402 = vrot.slane %v1401, 1
    %v1403 = vadd.f32 %v1401, %v1402
    %v1404 = vadd.f32 %v1293, %v1305
    %v1405 = vrot.slane %v1404, 4
    %v1406 = vadd.f32 %v1404, %v1405
    %v1407 = vrot.slane %v1406, 2
    %v1408 = vadd.f32 %v1406, %v1407
    %v1409 = vrot.slane %v1408, 1
    %v1410 = vadd.f32 %v1408, %v1409
    %v1411 = vadd.f32 %v1294, %v1306
    %v1412 = vrot.slane %v1411, 4
    %v1413 = vadd.f32 %v1411, %v1412
    %v1414 = vrot.slane %v1413, 2
    %v1415 = vadd.f32 %v1413, %v1414
    %v1416 = vrot.slane %v1415, 1
    %v1417 = vadd.f32 %v1415, %v1416
    %v1418 = vadd.f32 %v1307, %v1319
    %v1419 = vrot.slane %v1418, 4
    %v1420 = vadd.f32 %v1418, %v1419
    %v1421 = vrot.slane %v1420, 2
    %v1422 = vadd.f32 %v1420, %v1421
    %v1423 = vrot.slane %v1422, 1
    %v1424 = vadd.f32 %v1422, %v1423
    %v1425 = vadd.f32 %v1308, %v1320
    %v1426 = vrot.slane %v1425, 4
    %v1427 = vadd.f32 %v1425, %v1426
    %v1428 = vrot.slane %v1427, 2
    %v1429 = vadd.f32 %v1427, %v1428
    %v1430 = vrot.slane %v1429, 1
    %v1431 = vadd.f32 %v1429, %v1430
    %v1432 = vadd.f32 %v1309, %v1321
    %v1433 = vrot.slane %v1432, 4
    %v1434 = vadd.f32 %v1432, %v1433
    %v1435 = vrot.slane %v1434, 2
    %v1436 = vadd.f32 %v1434, %v1435
    %v1437 = vrot.slane %v1436, 1
    %v1438 = vadd.f32 %v1436, %v1437
    %v1439 = vadd.f32 %v1310, %v1322
    %v1440 = vrot.slane %v1439, 4
    %v1441 = vadd.f32 %v1439, %v1440
    %v1442 = vrot.slane %v1441, 2
    %v1443 = vadd.f32 %v1441, %v1442
    %v1444 = vrot.slane %v1443, 1
    %v1445 = vadd.f32 %v1443, %v1444
    %v1446 = vadd.f32 %v1311, %v1323
    %v1447 = vrot.slane %v1446, 4
    %v1448 = vadd.f32 %v1446, %v1447
    %v1449 = vrot.slane %v1448, 2
    %v1450 = vadd.f32 %v1448, %v1449
    %v1451 = vrot.slane %v1450, 1
    %v1452 = vadd.f32 %v1450, %v1451
    %v1453 = vadd.f32 %v1312, %v1324
    %v1454 = vrot.slane %v1453, 4
    %v1455 = vadd.f32 %v1453, %v1454
    %v1456 = vrot.slane %v1455, 2
    %v1457 = vadd.f32 %v1455, %v1456
    %v1458 = vrot.slane %v1457, 1
    %v1459 = vadd.f32 %v1457, %v1458
    %v1460 = vadd.f32 %v1313, %v1325
    %v1461 = vrot.slane %v1460, 4
    %v1462 = vadd.f32 %v1460, %v1461
    %v1463 = vrot.slane %v1462, 2
    %v1464 = vadd.f32 %v1462, %v1463
    %v1465 = vrot.slane %v1464, 1
    %v1466 = vadd.f32 %v1464, %v1465
    %v1467 = vadd.f32 %v1314, %v1326
    %v1468 = vrot.slane %v1467, 4
    %v1469 = vadd.f32 %v1467, %v1468
    %v1470 = vrot.slane %v1469, 2
    %v1471 = vadd.f32 %v1469, %v1470
    %v1472 = vrot.slane %v1471, 1
    %v1473 = vadd.f32 %v1471, %v1472
    %v1474 = vadd.f32 %v1315, %v1327
    %v1475 = vrot.slane %v1474, 4
    %v1476 = vadd.f32 %v1474, %v1475
    %v1477 = vrot.slane %v1476, 2
    %v1478 = vadd.f32 %v1476, %v1477
    %v1479 = vrot.slane %v1478, 1
    %v1480 = vadd.f32 %v1478, %v1479
    %v1481 = vadd.f32 %v1316, %v1328
    %v1482 = vrot.slane %v1481, 4
    %v1483 = vadd.f32 %v1481, %v1482
    %v1484 = vrot.slane %v1483, 2
    %v1485 = vadd.f32 %v1483, %v1484
    %v1486 = vrot.slane %v1485, 1
    %v1487 = vadd.f32 %v1485, %v1486
    %v1488 = vadd.f32 %v1317, %v1329
    %v1489 = vrot.slane %v1488, 4
    %v1490 = vadd.f32 %v1488, %v1489
    %v1491 = vrot.slane %v1490, 2
    %v1492 = vadd.f32 %v1490, %v1491
    %v1493 = vrot.slane %v1492, 1
    %v1494 = vadd.f32 %v1492, %v1493
    %v1495 = vadd.f32 %v1318, %v1330
    %v1496 = vrot.slane %v1495, 4
    %v1497 = vadd.f32 %v1495, %v1496
    %v1498 = vrot.slane %v1497, 2
    %v1499 = vadd.f32 %v1497, %v1498
    %v1500 = vrot.slane %v1499, 1
    %v1501 = vadd.f32 %v1499, %v1500
    %v1526 = vcombine.low %v1340, %v1347
    %v1527 = vcombine.low %v1354, %v1361
    %v1529 = vunpack.c.l.s4 1983009808
    %v1530 = vunpack.c.0.s8 %v1529
    %v1531 = vlaneseq
    %v1532 = vshrl.u32 %v1531, 7
    %v1533 = vsub.s32 %v1530, %v1532
    %v1534 = vrot.slane %v1526, %v1533
    %v1536 = vunpack.c.l.s4 1983009808
    %v1537 = vunpack.c.0.s8 %v1536
    %v1538 = vlaneseq
    %v1539 = vshrl.u32 %v1538, 7
    %v1540 = vsub.s32 %v1537, %v1539
    %v1541 = vrot.slane %v1527, %v1540
    %v1542 = vcombine.low %v1534, %v1541
    %v1543 = vcombine.low %v1368, %v1375
    %v1544 = vcombine.low %v1382, %v1389
    %v1546 = vunpack.c.l.s4 1983009808
    %v1547 = vunpack.c.0.s8 %v1546
    %v1548 = vlaneseq
    %v1549 = vshrl.u32 %v1548, 7
    %v1550 = vsub.s32 %v1547, %v1549
    %v1551 = vrot.slane %v1543, %v1550
    %v1553 = vunpack.c.l.s4 1983009808
    %v1554 = vunpack.c.0.s8 %v1553
    %v1555 = vlaneseq
    %v1556 = vshrl.u32 %v1555, 7
    %v1557 = vsub.s32 %v1554, %v1556
    %v1558 = vrot.slane %v1544, %v1557
    %v1559 = vcombine.low %v1551, %v1558
    %v1560 = vcombine.low %v1396, %v1403
    %v1561 = vcombine.low %v1410, %v1417
    %v1563 = vunpack.c.l.s4 1983009808
    %v1564 = vunpack.c.0.s8 %v1563
    %v1565 = vlaneseq
    %v1566 = vshrl.u32 %v1565, 7
    %v1567 = vsub.s32 %v1564, %v1566
    %v1568 = vrot.slane %v1560, %v1567
    %v1570 = vunpack.c.l.s4 1983009808
    %v1571 = vunpack.c.0.s8 %v1570
    %v1572 = vlaneseq
    %v1573 = vshrl.u32 %v1572, 7
    %v1574 = vsub.s32 %v1571, %v1573
    %v1575 = vrot.slane %v1561, %v1574
    %v1576 = vcombine.low %v1568, %v1575
    %v1577 = vcombine.low %v1424, %v1431
    %v1578 = vcombine.low %v1438, %v1445
    %v1580 = vunpack.c.l.s4 1983009808
    %v1581 = vunpack.c.0.s8 %v1580
    %v1582 = vlaneseq
    %v1583 = vshrl.u32 %v1582, 7
    %v1584 = vsub.s32 %v1581, %v1583
    %v1585 = vrot.slane %v1577, %v1584
    %v1587 = vunpack.c.l.s4 1983009808
    %v1588 = vunpack.c.0.s8 %v1587
    %v1589 = vlaneseq
    %v1590 = vshrl.u32 %v1589, 7
    %v1591 = vsub.s32 %v1588, %v1590
    %v1592 = vrot.slane %v1578, %v1591
    %v1593 = vcombine.low %v1585, %v1592
    %v1594 = vcombine.low %v1452, %v1459
    %v1595 = vcombine.low %v1466, %v1473
    %v1597 = vunpack.c.l.s4 1983009808
    %v1598 = vunpack.c.0.s8 %v1597
    %v1599 = vlaneseq
    %v1600 = vshrl.u32 %v1599, 7
    %v1601 = vsub.s32 %v1598, %v1600
    %v1602 = vrot.slane %v1594, %v1601
    %v1604 = vunpack.c.l.s4 1983009808
    %v1605 = vunpack.c.0.s8 %v1604
    %v1606 = vlaneseq
    %v1607 = vshrl.u32 %v1606, 7
    %v1608 = vsub.s32 %v1605, %v1607
    %v1609 = vrot.slane %v1595, %v1608
    %v1610 = vcombine.low %v1602, %v1609
    %v1611 = vcombine.low %v1480, %v1487
    %v1612 = vcombine.low %v1494, %v1501
    %v1614 = vunpack.c.l.s4 1983009808
    %v1615 = vunpack.c.0.s8 %v1614
    %v1616 = vlaneseq
    %v1617 = vshrl.u32 %v1616, 7
    %v1618 = vsub.s32 %v1615, %v1617
    %v1619 = vrot.slane %v1611, %v1618
    %v1621 = vunpack.c.l.s4 1983009808
    %v1622 = vunpack.c.0.s8 %v1621
    %v1623 = vlaneseq
    %v1624 = vshrl.u32 %v1623, 7
    %v1625 = vsub.s32 %v1622, %v1624
    %v1626 = vrot.slane %v1612, %v1625
    %v1627 = vcombine.low %v1619, %v1626
    %v1628 = vsel %vm416, %v1542, %v1542
    %v1629 = vsel %vm418, %v1542, %v1628
    %v1630 = vrot.slane %v1593, 7
    %v1631 = vsel %vm421, %v1630, %v1629
    %v1632 = vsel %vm423, %v1630, %v1631
    %v1633 = vsel %vm425, %v1630, %v1632
    %v1634 = vsel %vm427, %v1630, %v1633
    %v1635 = vsel %vm416, %v1559, %v1559
    %v1636 = vsel %vm418, %v1559, %v1635
    %v1637 = vrot.slane %v1610, 7
    %v1638 = vsel %vm421, %v1637, %v1636
    %v1639 = vsel %vm423, %v1637, %v1638
    %v1640 = vsel %vm425, %v1637, %v1639
    %v1641 = vsel %vm427, %v1637, %v1640
    %v1642 = vsel %vm416, %v1576, %v1576
    %v1643 = vsel %vm418, %v1576, %v1642
    %v1644 = vrot.slane %v1627, 7
    %v1645 = vsel %vm421, %v1644, %v1643
    %v1646 = vsel %vm423, %v1644, %v1645
    %v1647 = vsel %vm425, %v1644, %v1646
    %v1648 = vsel %vm427, %v1644, %v1647
    %v1652 = vadd.f32 %v1331, %v1634
    %v1653 = vadd.f32 %v1332, %v1641
    %v1654 = vadd.f32 %v1333, %v1648
    %1655 = vst [vmem:[#allocation2] sm:$0xff] %v1652
    %1656 = vst [vmem:[#allocation2 + $0x8] sm:$0xff] %v1653
    %1657 = vst [vmem:[#allocation2 + $0x10] sm:$0xff] %v1654
    %v1658 = vld [vmem:[#allocation2] sm:$0xff]
    %v1659 = vld [vmem:[#allocation2 + $0x8] sm:$0xff]
    %v1660 = vld [vmem:[#allocation2 + $0x10] sm:$0xff]
    %v1661 = vmul.f32 %v1658, 0.015625
    %v1662 = vmul.f32 %v1659, 0.015625
    %v1663 = vmul.f32 %v1660, 0.015625
    %v1664 = vld [vmem:[#allocation6] sm:$0xff]
    %v1665 = vld [vmem:[#allocation6 + $0x8] sm:$0xf]
    %v1668 = vlaneseq
    %v1669 = vshrl.u32 %v1668, 7
    %v1670 = vsub.s32 0, %v1669
    %v1671 = vrot.slane %v1664, %v1670
    %v1672 = vlaneseq
    %v1673 = vshrl.u32 %v1672, 7
    %v1674 = vsub.s32 1, %v1673
    %v1675 = vrot.slane %v1664, %v1674
    %v1676 = vlaneseq
    %v1677 = vshrl.u32 %v1676, 7
    %v1678 = vsub.s32 2, %v1677
    %v1679 = vrot.slane %v1664, %v1678
    %v1680 = vlaneseq
    %v1681 = vshrl.u32 %v1680, 7
    %v1682 = vsub.s32 3, %v1681
    %v1683 = vrot.slane %v1664, %v1682
    %v1684 = vlaneseq
    %v1685 = vshrl.u32 %v1684, 7
    %v1686 = vsub.s32 4, %v1685
    %v1687 = vrot.slane %v1664, %v1686
    %v1688 = vlaneseq
    %v1689 = vshrl.u32 %v1688, 7
    %v1690 = vsub.s32 5, %v1689
    %v1691 = vrot.slane %v1664, %v1690
    %v1692 = vlaneseq
    %v1693 = vshrl.u32 %v1692, 7
    %v1694 = vsub.s32 6, %v1693
    %v1695 = vrot.slane %v1664, %v1694
    %v1696 = vlaneseq
    %v1697 = vshrl.u32 %v1696, 7
    %v1698 = vsub.s32 7, %v1697
    %v1699 = vrot.slane %v1664, %v1698
    %v1700 = vlaneseq
    %v1701 = vshrl.u32 %v1700, 7
    %v1702 = vsub.s32 0, %v1701
    %v1703 = vrot.slane %v1665, %v1702
    %v1704 = vlaneseq
    %v1705 = vshrl.u32 %v1704, 7
    %v1706 = vsub.s32 1, %v1705
    %v1707 = vrot.slane %v1665, %v1706
    %v1708 = vlaneseq
    %v1709 = vshrl.u32 %v1708, 7
    %v1710 = vsub.s32 2, %v1709
    %v1711 = vrot.slane %v1665, %v1710
    %v1712 = vlaneseq
    %v1713 = vshrl.u32 %v1712, 7
    %v1714 = vsub.s32 3, %v1713
    %v1715 = vrot.slane %v1665, %v1714
    %v1716 = vcombine.low %v1671, %v1675
    %v1717 = vcombine.low %v1679, %v1683
    %v1719 = vunpack.c.l.s4 1983009808
    %v1720 = vunpack.c.0.s8 %v1719
    %v1721 = vlaneseq
    %v1722 = vshrl.u32 %v1721, 7
    %v1723 = vsub.s32 %v1720, %v1722
    %v1724 = vrot.slane %v1716, %v1723
    %v1726 = vunpack.c.l.s4 1983009808
    %v1727 = vunpack.c.0.s8 %v1726
    %v1728 = vlaneseq
    %v1729 = vshrl.u32 %v1728, 7
    %v1730 = vsub.s32 %v1727, %v1729
    %v1731 = vrot.slane %v1717, %v1730
    %v1732 = vcombine.low %v1724, %v1731
    %v1733 = vcombine.low %v1687, %v1691
    %v1734 = vcombine.low %v1695, %v1699
    %v1736 = vunpack.c.l.s4 1983009808
    %v1737 = vunpack.c.0.s8 %v1736
    %v1738 = vlaneseq
    %v1739 = vshrl.u32 %v1738, 7
    %v1740 = vsub.s32 %v1737, %v1739
    %v1741 = vrot.slane %v1733, %v1740
    %v1743 = vunpack.c.l.s4 1983009808
    %v1744 = vunpack.c.0.s8 %v1743
    %v1745 = vlaneseq
    %v1746 = vshrl.u32 %v1745, 7
    %v1747 = vsub.s32 %v1744, %v1746
    %v1748 = vrot.slane %v1734, %v1747
    %v1749 = vcombine.low %v1741, %v1748
    %v1750 = vcombine.low %v1703, %v1707
    %v1751 = vcombine.low %v1711, %v1715
    %v1753 = vunpack.c.l.s4 1983009808
    %v1754 = vunpack.c.0.s8 %v1753
    %v1755 = vlaneseq
    %v1756 = vshrl.u32 %v1755, 7
    %v1757 = vsub.s32 %v1754, %v1756
    %v1758 = vrot.slane %v1750, %v1757
    %v1760 = vunpack.c.l.s4 1983009808
    %v1761 = vunpack.c.0.s8 %v1760
    %v1762 = vlaneseq
    %v1763 = vshrl.u32 %v1762, 7
    %v1764 = vsub.s32 %v1761, %v1763
    %v1765 = vrot.slane %v1751, %v1764
    %v1766 = vcombine.low %v1758, %v1765
    %v1770 = vmul.f32 %v1661, %v1732
    %v1771 = vmul.f32 %v1662, %v1749
    %v1772 = vmul.f32 %v1663, %v1766
    %v1776 = vcombine.high %v1770, %v1770
    %v1778 = vunpack.c.l.s4 1983009808
    %v1779 = vunpack.c.0.s8 %v1778
    %v1780 = vlaneseq
    %v1781 = vshrl.u32 %v1780, 7
    %v1782 = vsub.s32 %v1779, %v1781
    %v1783 = vrot.slane %v1770, %v1782
    %v1785 = vunpack.c.l.s4 1983009808
    %v1786 = vunpack.c.0.s8 %v1785
    %v1787 = vlaneseq
    %v1788 = vshrl.u32 %v1787, 7
    %v1789 = vsub.s32 %v1786, %v1788
    %v1790 = vrot.slane %v1776, %v1789
    %v1791 = vcombine.high %v1783, %v1783
    %v1792 = vcombine.high %v1790, %v1790
    %v1793 = vcombine.high %v1771, %v1771
    %v1795 = vunpack.c.l.s4 1983009808
    %v1796 = vunpack.c.0.s8 %v1795
    %v1797 = vlaneseq
    %v1798 = vshrl.u32 %v1797, 7
    %v1799 = vsub.s32 %v1796, %v1798
    %v1800 = vrot.slane %v1771, %v1799
    %v1802 = vunpack.c.l.s4 1983009808
    %v1803 = vunpack.c.0.s8 %v1802
    %v1804 = vlaneseq
    %v1805 = vshrl.u32 %v1804, 7
    %v1806 = vsub.s32 %v1803, %v1805
    %v1807 = vrot.slane %v1793, %v1806
    %v1808 = vcombine.high %v1800, %v1800
    %v1809 = vcombine.high %v1807, %v1807
    %v1810 = vcombine.high %v1772, %v1772
    %v1812 = vunpack.c.l.s4 1983009808
    %v1813 = vunpack.c.0.s8 %v1812
    %v1814 = vlaneseq
    %v1815 = vshrl.u32 %v1814, 7
    %v1816 = vsub.s32 %v1813, %v1815
    %v1817 = vrot.slane %v1772, %v1816
    %v1819 = vunpack.c.l.s4 1983009808
    %v1820 = vunpack.c.0.s8 %v1819
    %v1821 = vlaneseq
    %v1822 = vshrl.u32 %v1821, 7
    %v1823 = vsub.s32 %v1820, %v1822
    %v1824 = vrot.slane %v1810, %v1823
    %v1825 = vcombine.high %v1817, %v1817
    %v1826 = vcombine.high %v1824, %v1824
    %vm1839 = vcmask 1041408
    %v1840 = vsel %vm1839, %v1783, 0.0
    %v1841 = vsel %vm1839, %v1791, 0.0
    %v1842 = vadd.f32 %v1840, %v1841
    %v1843 = vsel %vm1839, %v1790, 0.0
    %v1844 = vadd.f32 %v1842, %v1843
    %v1845 = vsel %vm1839, %v1792, 0.0
    %v1846 = vadd.f32 %v1844, %v1845
    %v1847 = vsel %vm1839, %v1800, 0.0
    %v1848 = vadd.f32 %v1846, %v1847
    %v1849 = vsel %vm1839, %v1808, 0.0
    %v1850 = vadd.f32 %v1848, %v1849
    %v1851 = vsel %vm1839, %v1807, 0.0
    %v1852 = vadd.f32 %v1850, %v1851
    %v1853 = vsel %vm1839, %v1809, 0.0
    %v1854 = vadd.f32 %v1852, %v1853
    %v1855 = vsel %vm1839, %v1817, 0.0
    %v1856 = vadd.f32 %v1854, %v1855
    %v1857 = vsel %vm1839, %v1825, 0.0
    %v1858 = vadd.f32 %v1856, %v1857
    %v1859 = vsel %vm1839, %v1824, 0.0
    %v1860 = vadd.f32 %v1858, %v1859
    %v1861 = vsel %vm1839, %v1826, 0.0
    %v1862 = vadd.f32 %v1860, %v1861
    %1863 = vadd.xlane.f32.xlu0 %v1862
    %v1864 = vpop.xlane.xlu0 %1863
    %s1865 = sld [smem:[#allocation3]]
    %v1866 = vstv %s1865
    %v1867 = vadd.f32 %v1864, %v1866
    %vm1868 = vcmask 1024
    %1869 = vst.msk [vmem:[%s3] sm:$0x3] %vm1868, %v1867
    // Predicated region
    $region22: #{tpu_custom_call.1} parent=1 // pred_check
      _
    $region23: #{tpu_custom_call.1} parent=1 // pred_check_branch
      %1871 = sbr.rel (0) target = $region25
    $region24: #{tpu_custom_call.1} parent=1 // pred_region
      _
    $region25: #{tpu_custom_call.1} parent=1 // pred_fallthru
      _
    // Predicated region
    $region26: #{tpu_custom_call.1} parent=1 // pred_check
      _
    $region27: #{tpu_custom_call.1} parent=1 // pred_check_branch
      %1873 = sbr.rel (0) target = $region29
    $region28: #{tpu_custom_call.1} parent=1 // pred_region
      _
    $region29: #{tpu_custom_call.1} parent=1 // pred_fallthru
      _
    %1874 = vsyncpa [#allocation5], 1
    %1875 = vsyncpa [#allocation7], 1

</llo_original>
